<compile_context>
chip_gen: v6e
topology: v6e:2x2x1
jax: 0.10.0
libtpu: 0.0.40
codegen_flags: <defaults>
</compile_context>

<pallas_src>
import math

import jax
import jax.numpy as jnp
from jax import lax
from jax.experimental import pallas as pl
from jax.experimental.pallas import tpu as pltpu

# ---- hyper-parameters mirroring the PyTorch module -------------------------
FP_LENGTH = 8                      # fp_length
EMB_DIM = 3                        # emb_dim (also per-position vocab size)
D_IN = FP_LENGTH * EMB_DIM         # 24 = LSTM input_size
HIDDEN = 64                        # LSTM hidden_size / lin input
LANE = 128                         # TPU lane width; everything padded to this
GATE_W = 4 * LANE                  # i|f|g|o gates, each padded to its own 128-lane block


def _sig(v):
    """Tanh-form sigmoid: one EUP transcendental instead of exp + reciprocal."""
    return 0.5 * (jnp.tanh(0.5 * v) + 1.0)


def mlp_lstm_kernel(x_ref, wih_ref, whh_ref, bias_ref, lin_w_ref, lin_b_ref,
                    out_ref, xg_scr, hall_scr):
    B = x_ref.shape[0]
    ids = x_ref[...]                                            # (B, FP) int32

    # --- FingerprintsEncoder fused with input->gate matmul.
    # One-hot over a single 128-lane vreg: lane (id_i + 3*i) per position i.
    lane = lax.broadcasted_iota(jnp.int32, (B, LANE), 1)
    onehot = jnp.zeros((B, LANE), jnp.float32)
    for i in range(FP_LENGTH):                                  # 8 full-vreg VPU compares
        onehot = onehot + (lane == (ids[:, i:i + 1] + EMB_DIM * i)).astype(jnp.float32)

    # wih_ref already contains embblk @ wih (folded in pad_params), so one batched matmul
    # produces the input-to-gate contribution for ALL time steps. Spill to VMEM scratch so
    # the unrolled recurrence only keeps 2 state vregs + 1 gate row live.
    xg_scr[...] = jnp.dot(onehot, wih_ref[...],
                          preferred_element_type=jnp.float32) + bias_ref[...]   # (B, 512)

    # Weight-stationary recurrence: load whh once, outside the serial loop.
    whh = whh_ref[...]                                          # (128, 512)

    # Sequential recurrence over the B time steps (inherently serial). B <= 16 here, so a
    # static unroll keeps all indices static.
    # TODO(synk): switch to lax.fori_loop(..., unroll=k) before scaling B.
    h = jnp.zeros((1, LANE), jnp.float32)
    c = jnp.zeros((1, LANE), jnp.float32)
    for t in range(B):
        gates = xg_scr[pl.ds(t, 1), :] + jnp.dot(h, whh,
                                                 preferred_element_type=jnp.float32)  # (1, 512)
        i_g = _sig(gates[:, 0 * LANE:1 * LANE])
        f_g = _sig(gates[:, 1 * LANE:2 * LANE])
        g_g = jnp.tanh(gates[:, 2 * LANE:3 * LANE])
        o_g = _sig(gates[:, 3 * LANE:4 * LANE])
        c = f_g * c + i_g * g_g
        h = o_g * jnp.tanh(c)
        hall_scr[pl.ds(t, 1), :] = h                            # lane-dense row store

    # --- lin(64 -> 1) + sigmoid on the lane-padded (B,128) hidden states.
    logits = jnp.dot(hall_scr[...], lin_w_ref[...],
                     preferred_element_type=jnp.float32) + lin_b_ref[...]      # (B, 128)
    out_ref[...] = _sig(logits)                                 # real result in lane 0


def mlp_with_lstm(x_ids, padded_params):
    """x_ids: (B, FP_LENGTH) int32 in [0, EMB_DIM). Returns (B, 1) float32."""
    B = x_ids.shape[0]
    inputs = (x_ids,) + tuple(padded_params)
    out = pl.pallas_call(
        mlp_lstm_kernel,
        out_shape=jax.ShapeDtypeStruct((B, LANE), jnp.float32),
        in_specs=[pl.BlockSpec(memory_space=pltpu.MemorySpace.VMEM) for _ in inputs],
        out_specs=pl.BlockSpec(memory_space=pltpu.MemorySpace.VMEM),
        scratch_shapes=[pltpu.VMEM((B, GATE_W), jnp.float32),    # xg (input->gate, all steps)
                        pltpu.VMEM((B, LANE), jnp.float32)],     # all h_t, lane-dense
    )(*inputs)
    return out[:, :1]                                            # drop lane padding


# ---- parameter construction -------------------------------------------------
def init_raw_params(key):
    """Parameters in PyTorch layout (unpadded)."""
    ks = jax.random.split(key, 8)

    def u(k, shape, bound):
        return jax.random.uniform(k, shape, jnp.float32, -bound, bound)

    emb_bound = math.sqrt(6.0 / (EMB_DIM + EMB_DIM))             # xavier_uniform
    emb_tables = u(ks[0], (FP_LENGTH, EMB_DIM, EMB_DIM), emb_bound)
    k_lstm = 1.0 / math.sqrt(HIDDEN)
    w_ih = u(ks[1], (4 * HIDDEN, D_IN), k_lstm)                  # gate order i|f|g|o
    w_hh = u(ks[2], (4 * HIDDEN, HIDDEN), k_lstm)
    b_ih = u(ks[3], (4 * HIDDEN,), k_lstm)
    b_hh = u(ks[4], (4 * HIDDEN,), k_lstm)
    k_lin = 1.0 / math.sqrt(HIDDEN)
    lin_w = u(ks[5], (1, HIDDEN), k_lin)
    lin_b = u(ks[6], (1,), k_lin)
    return emb_tables, w_ih, w_hh, b_ih, b_hh, lin_w, lin_b


def pad_params(raw):
    """Repack PyTorch-layout params into lane-dense, transposed, zero-padded blocks.

    The block-diagonal embedding table is folded into the input-to-gate weight:
        onehot @ (embblk @ wih_pad) == cat(per-pos lookups) @ wih_pad
    so the kernel never materializes the (B, 24) embedding.
    """
    emb_tables, w_ih, w_hh, b_ih, b_hh, lin_w, lin_b = raw

    embblk = jnp.zeros((LANE, LANE), jnp.float32)
    for i in range(FP_LENGTH):
        embblk = embblk.at[EMB_DIM * i:EMB_DIM * (i + 1),
                           EMB_DIM * i:EMB_DIM * (i + 1)].set(emb_tables[i])

    wih_pad = jnp.zeros((LANE, GATE_W), jnp.float32)
    whh_pad = jnp.zeros((LANE, GATE_W), jnp.float32)
    bias_pad = jnp.zeros((1, GATE_W), jnp.float32)
    for g in range(4):                                           # each gate -> own 128-lane block
        wih_pad = wih_pad.at[:D_IN, g * LANE:g * LANE + HIDDEN].set(
            w_ih[g * HIDDEN:(g + 1) * HIDDEN, :].T)
        whh_pad = whh_pad.at[:HIDDEN, g * LANE:g * LANE + HIDDEN].set(
            w_hh[g * HIDDEN:(g + 1) * HIDDEN, :].T)
        bias_pad = bias_pad.at[0, g * LANE:g * LANE + HIDDEN].set(
            b_ih[g * HIDDEN:(g + 1) * HIDDEN] + b_hh[g * HIDDEN:(g + 1) * HIDDEN])

    wih_fused = embblk @ wih_pad                                 # (128, 512), fold embedding

    lin_w_pad = jnp.zeros((LANE, LANE), jnp.float32).at[:HIDDEN, 0].set(lin_w[0])
    lin_b_pad = jnp.zeros((1, LANE), jnp.float32).at[0, 0].set(lin_b[0])
    return wih_fused, whh_pad, bias_pad, lin_w_pad, lin_b_pad


# ---- pure-JAX reference (mirrors the PyTorch forward) -----------------------
def ref_forward(x_ids, raw):
    emb_tables, w_ih, w_hh, b_ih, b_hh, lin_w, lin_b = raw
    emb = jnp.concatenate([emb_tables[i][x_ids[:, i]] for i in range(FP_LENGTH)], axis=1)

    def step(carry, x_t):
        h, c = carry
        gates = x_t @ w_ih.T + b_ih + h @ w_hh.T + b_hh
        i_g, f_g, g_g, o_g = jnp.split(gates, 4)
        c = jax.nn.sigmoid(f_g) * c + jax.nn.sigmoid(i_g) * jnp.tanh(g_g)
        h = jax.nn.sigmoid(o_g) * jnp.tanh(c)
        return (h, c), h

    init = (jnp.zeros(HIDDEN, jnp.float32), jnp.zeros(HIDDEN, jnp.float32))
    _, hs = lax.scan(step, init, emb)
    return jax.nn.sigmoid(hs @ lin_w.T + lin_b)


if __name__ == "__main__":
    key = jax.random.PRNGKey(0)
    k_x, k_p = jax.random.split(key)
    B = 8   # batch; also the sequence length seen by the (unbatched) LSTM
    x_ids = jax.random.randint(k_x, (B, FP_LENGTH), 0, EMB_DIM, dtype=jnp.int32)

    raw = init_raw_params(k_p)
    padded = pad_params(raw)

    out = mlp_with_lstm(x_ids, padded)
    out = jax.block_until_ready(out)
    assert out.shape == (B, 1) and out.dtype == jnp.float32
    assert bool(jnp.all(jnp.isfinite(out)))

    ref = ref_forward(x_ids, raw)
    assert bool(jnp.allclose(out, ref, atol=5e-3, rtol=0.0)), (out, ref)
    print("KERNEL_OK")
</pallas_src>

<mosaic_0001>
module attributes {stable_mosaic.version = 11 : i64} {
  func.func @mlp_lstm_kernel(%arg0: memref<8x8xi32, #tpu.memory_space<vmem>>, %arg1: memref<128x512xf32, #tpu.memory_space<vmem>>, %arg2: memref<128x512xf32, #tpu.memory_space<vmem>>, %arg3: memref<1x512xf32, #tpu.memory_space<vmem>>, %arg4: memref<128x128xf32, #tpu.memory_space<vmem>>, %arg5: memref<1x128xf32, #tpu.memory_space<vmem>>, %arg6: memref<8x128xf32, #tpu.memory_space<vmem>>, %arg7: memref<8x512xf32, #tpu.memory_space<vmem>>, %arg8: memref<8x128xf32, #tpu.memory_space<vmem>>) attributes {dimension_semantics = [], scalar_prefetch = 0 : i64, scratch_operands = 2 : i64, tpu.core_type = #tpu.core_type<tc>} {
    %c0 = arith.constant 0 : index
    %c0_0 = arith.constant 0 : index
    %0 = vector.load %arg0[%c0, %c0_0] : memref<8x8xi32, #tpu.memory_space<vmem>>, vector<8x8xi32>
    %1 = tpu.iota {dimensions = array<i32: 1>} : vector<8x128xi32>
    %cst = arith.constant 0.000000e+00 : f32
    %2 = vector.broadcast %cst : f32 to vector<8x128xf32>
    %3 = vector.extract_strided_slice %0 {offsets = [0, 0], sizes = [8, 1], strides = [1, 1]} : vector<8x8xi32> to vector<8x1xi32>
    %c0_i32 = arith.constant 0 : i32
    %4 = vector.broadcast %c0_i32 : i32 to vector<8x1xi32>
    %5 = arith.addi %3, %4 : vector<8x1xi32>
    %6 = vector.broadcast %5 : vector<8x1xi32> to vector<8x128xi32>
    %7 = arith.cmpi eq, %1, %6 : vector<8x128xi32>
    %8 = arith.extui %7 : vector<8x128xi1> to vector<8x128xi32>
    %9 = arith.sitofp %8 : vector<8x128xi32> to vector<8x128xf32>
    %10 = arith.addf %2, %9 : vector<8x128xf32>
    %11 = vector.extract_strided_slice %0 {offsets = [0, 1], sizes = [8, 1], strides = [1, 1]} : vector<8x8xi32> to vector<8x1xi32>
    %c3_i32 = arith.constant 3 : i32
    %12 = vector.broadcast %c3_i32 : i32 to vector<8x1xi32>
    %13 = arith.addi %11, %12 : vector<8x1xi32>
    %14 = vector.broadcast %13 : vector<8x1xi32> to vector<8x128xi32>
    %15 = arith.cmpi eq, %1, %14 : vector<8x128xi32>
    %16 = arith.extui %15 : vector<8x128xi1> to vector<8x128xi32>
    %17 = arith.sitofp %16 : vector<8x128xi32> to vector<8x128xf32>
    %18 = arith.addf %10, %17 : vector<8x128xf32>
    %19 = vector.extract_strided_slice %0 {offsets = [0, 2], sizes = [8, 1], strides = [1, 1]} : vector<8x8xi32> to vector<8x1xi32>
    %c6_i32 = arith.constant 6 : i32
    %20 = vector.broadcast %c6_i32 : i32 to vector<8x1xi32>
    %21 = arith.addi %19, %20 : vector<8x1xi32>
    %22 = vector.broadcast %21 : vector<8x1xi32> to vector<8x128xi32>
    %23 = arith.cmpi eq, %1, %22 : vector<8x128xi32>
    %24 = arith.extui %23 : vector<8x128xi1> to vector<8x128xi32>
    %25 = arith.sitofp %24 : vector<8x128xi32> to vector<8x128xf32>
    %26 = arith.addf %18, %25 : vector<8x128xf32>
    %27 = vector.extract_strided_slice %0 {offsets = [0, 3], sizes = [8, 1], strides = [1, 1]} : vector<8x8xi32> to vector<8x1xi32>
    %c9_i32 = arith.constant 9 : i32
    %28 = vector.broadcast %c9_i32 : i32 to vector<8x1xi32>
    %29 = arith.addi %27, %28 : vector<8x1xi32>
    %30 = vector.broadcast %29 : vector<8x1xi32> to vector<8x128xi32>
    %31 = arith.cmpi eq, %1, %30 : vector<8x128xi32>
    %32 = arith.extui %31 : vector<8x128xi1> to vector<8x128xi32>
    %33 = arith.sitofp %32 : vector<8x128xi32> to vector<8x128xf32>
    %34 = arith.addf %26, %33 : vector<8x128xf32>
    %35 = vector.extract_strided_slice %0 {offsets = [0, 4], sizes = [8, 1], strides = [1, 1]} : vector<8x8xi32> to vector<8x1xi32>
    %c12_i32 = arith.constant 12 : i32
    %36 = vector.broadcast %c12_i32 : i32 to vector<8x1xi32>
    %37 = arith.addi %35, %36 : vector<8x1xi32>
    %38 = vector.broadcast %37 : vector<8x1xi32> to vector<8x128xi32>
    %39 = arith.cmpi eq, %1, %38 : vector<8x128xi32>
    %40 = arith.extui %39 : vector<8x128xi1> to vector<8x128xi32>
    %41 = arith.sitofp %40 : vector<8x128xi32> to vector<8x128xf32>
    %42 = arith.addf %34, %41 : vector<8x128xf32>
    %43 = vector.extract_strided_slice %0 {offsets = [0, 5], sizes = [8, 1], strides = [1, 1]} : vector<8x8xi32> to vector<8x1xi32>
    %c15_i32 = arith.constant 15 : i32
    %44 = vector.broadcast %c15_i32 : i32 to vector<8x1xi32>
    %45 = arith.addi %43, %44 : vector<8x1xi32>
    %46 = vector.broadcast %45 : vector<8x1xi32> to vector<8x128xi32>
    %47 = arith.cmpi eq, %1, %46 : vector<8x128xi32>
    %48 = arith.extui %47 : vector<8x128xi1> to vector<8x128xi32>
    %49 = arith.sitofp %48 : vector<8x128xi32> to vector<8x128xf32>
    %50 = arith.addf %42, %49 : vector<8x128xf32>
    %51 = vector.extract_strided_slice %0 {offsets = [0, 6], sizes = [8, 1], strides = [1, 1]} : vector<8x8xi32> to vector<8x1xi32>
    %c18_i32 = arith.constant 18 : i32
    %52 = vector.broadcast %c18_i32 : i32 to vector<8x1xi32>
    %53 = arith.addi %51, %52 : vector<8x1xi32>
    %54 = vector.broadcast %53 : vector<8x1xi32> to vector<8x128xi32>
    %55 = arith.cmpi eq, %1, %54 : vector<8x128xi32>
    %56 = arith.extui %55 : vector<8x128xi1> to vector<8x128xi32>
    %57 = arith.sitofp %56 : vector<8x128xi32> to vector<8x128xf32>
    %58 = arith.addf %50, %57 : vector<8x128xf32>
    %59 = vector.extract_strided_slice %0 {offsets = [0, 7], sizes = [8, 1], strides = [1, 1]} : vector<8x8xi32> to vector<8x1xi32>
    %c21_i32 = arith.constant 21 : i32
    %60 = vector.broadcast %c21_i32 : i32 to vector<8x1xi32>
    %61 = arith.addi %59, %60 : vector<8x1xi32>
    %62 = vector.broadcast %61 : vector<8x1xi32> to vector<8x128xi32>
    %63 = arith.cmpi eq, %1, %62 : vector<8x128xi32>
    %64 = arith.extui %63 : vector<8x128xi1> to vector<8x128xi32>
    %65 = arith.sitofp %64 : vector<8x128xi32> to vector<8x128xf32>
    %66 = arith.addf %58, %65 : vector<8x128xf32>
    %c0_1 = arith.constant 0 : index
    %c0_2 = arith.constant 0 : index
    %67 = vector.load %arg1[%c0_1, %c0_2] : memref<128x512xf32, #tpu.memory_space<vmem>>, vector<128x512xf32>
    %cst_3 = arith.constant dense<0.000000e+00> : vector<8x512xf32>
    %68 = tpu.matmul %66, %67, %cst_3 {dimension_numbers = #tpu.dot_dimension_numbers<[1], [0], [0], [1], [0, 0, 1, 1], [], []>} : vector<8x128xf32>, vector<128x512xf32>, vector<8x512xf32> -> vector<8x512xf32>
    %c0_4 = arith.constant 0 : index
    %c0_5 = arith.constant 0 : index
    %69 = vector.load %arg3[%c0_4, %c0_5] : memref<1x512xf32, #tpu.memory_space<vmem>>, vector<1x512xf32>
    %70 = vector.broadcast %69 : vector<1x512xf32> to vector<8x512xf32>
    %71 = arith.addf %68, %70 : vector<8x512xf32>
    %c0_6 = arith.constant 0 : index
    %c0_7 = arith.constant 0 : index
    %72 = vector.load %arg7[%c0_6, %c0_7] : memref<8x512xf32, #tpu.memory_space<vmem>>, vector<8x512xf32>
    tpu.vector_store %arg7[%c0_6, %c0_7], %71 {strides = array<i32>} : memref<8x512xf32, #tpu.memory_space<vmem>>, vector<8x512xf32>,
    %c0_8 = arith.constant 0 : index
    %c0_9 = arith.constant 0 : index
    %73 = vector.load %arg2[%c0_8, %c0_9] : memref<128x512xf32, #tpu.memory_space<vmem>>, vector<128x512xf32>
    %cst_10 = arith.constant 0.000000e+00 : f32
    %74 = vector.broadcast %cst_10 : f32 to vector<1x128xf32>
    %cst_11 = arith.constant 0.000000e+00 : f32
    %75 = vector.broadcast %cst_11 : f32 to vector<1x128xf32>
    %c0_12 = arith.constant 0 : index
    %c0_13 = arith.constant 0 : index
    %76 = vector.load %arg7[%c0_12, %c0_13] : memref<8x512xf32, #tpu.memory_space<vmem>>, vector<1x512xf32>
    %cst_14 = arith.constant dense<0.000000e+00> : vector<1x512xf32>
    %77 = tpu.matmul %74, %73, %cst_14 {dimension_numbers = #tpu.dot_dimension_numbers<[1], [0], [0], [1], [0, 0, 1, 1], [], []>} : vector<1x128xf32>, vector<128x512xf32>, vector<1x512xf32> -> vector<1x512xf32>
    %78 = arith.addf %76, %77 : vector<1x512xf32>
    %79 = vector.extract_strided_slice %78 {offsets = [0, 0], sizes = [1, 128], strides = [1, 1]} : vector<1x512xf32> to vector<1x128xf32>
    %cst_15 = arith.constant 5.000000e-01 : f32
    %80 = vector.broadcast %cst_15 : f32 to vector<1x128xf32>
    %81 = arith.mulf %80, %79 : vector<1x128xf32>
    %82 = math.tanh %81 : vector<1x128xf32>
    %cst_16 = arith.constant 1.000000e+00 : f32
    %83 = vector.broadcast %cst_16 : f32 to vector<1x128xf32>
    %84 = arith.addf %82, %83 : vector<1x128xf32>
    %cst_17 = arith.constant 5.000000e-01 : f32
    %85 = vector.broadcast %cst_17 : f32 to vector<1x128xf32>
    %86 = arith.mulf %85, %84 : vector<1x128xf32>
    %87 = vector.extract_strided_slice %78 {offsets = [0, 128], sizes = [1, 128], strides = [1, 1]} : vector<1x512xf32> to vector<1x128xf32>
    %cst_18 = arith.constant 5.000000e-01 : f32
    %88 = vector.broadcast %cst_18 : f32 to vector<1x128xf32>
    %89 = arith.mulf %88, %87 : vector<1x128xf32>
    %90 = math.tanh %89 : vector<1x128xf32>
    %cst_19 = arith.constant 1.000000e+00 : f32
    %91 = vector.broadcast %cst_19 : f32 to vector<1x128xf32>
    %92 = arith.addf %90, %91 : vector<1x128xf32>
    %cst_20 = arith.constant 5.000000e-01 : f32
    %93 = vector.broadcast %cst_20 : f32 to vector<1x128xf32>
    %94 = arith.mulf %93, %92 : vector<1x128xf32>
    %95 = vector.extract_strided_slice %78 {offsets = [0, 256], sizes = [1, 128], strides = [1, 1]} : vector<1x512xf32> to vector<1x128xf32>
    %96 = math.tanh %95 : vector<1x128xf32>
    %97 = vector.extract_strided_slice %78 {offsets = [0, 384], sizes = [1, 128], strides = [1, 1]} : vector<1x512xf32> to vector<1x128xf32>
    %cst_21 = arith.constant 5.000000e-01 : f32
    %98 = vector.broadcast %cst_21 : f32 to vector<1x128xf32>
    %99 = arith.mulf %98, %97 : vector<1x128xf32>
    %100 = math.tanh %99 : vector<1x128xf32>
    %cst_22 = arith.constant 1.000000e+00 : f32
    %101 = vector.broadcast %cst_22 : f32 to vector<1x128xf32>
    %102 = arith.addf %100, %101 : vector<1x128xf32>
    %cst_23 = arith.constant 5.000000e-01 : f32
    %103 = vector.broadcast %cst_23 : f32 to vector<1x128xf32>
    %104 = arith.mulf %103, %102 : vector<1x128xf32>
    %105 = arith.mulf %94, %75 : vector<1x128xf32>
    %106 = arith.mulf %86, %96 : vector<1x128xf32>
    %107 = arith.addf %105, %106 : vector<1x128xf32>
    %108 = math.tanh %107 : vector<1x128xf32>
    %109 = arith.mulf %104, %108 : vector<1x128xf32>
    %c0_24 = arith.constant 0 : index
    %c0_25 = arith.constant 0 : index
    %110 = vector.load %arg8[%c0_24, %c0_25] : memref<8x128xf32, #tpu.memory_space<vmem>>, vector<1x128xf32>
    tpu.vector_store %arg8[%c0_24, %c0_25], %109 {strides = array<i32>} : memref<8x128xf32, #tpu.memory_space<vmem>>, vector<1x128xf32>,
    %c1 = arith.constant 1 : index
    %c0_26 = arith.constant 0 : index
    %111 = vector.load %arg7[%c1, %c0_26] : memref<8x512xf32, #tpu.memory_space<vmem>>, vector<1x512xf32>
    %cst_27 = arith.constant dense<0.000000e+00> : vector<1x512xf32>
    %112 = tpu.matmul %109, %73, %cst_27 {dimension_numbers = #tpu.dot_dimension_numbers<[1], [0], [0], [1], [0, 0, 1, 1], [], []>} : vector<1x128xf32>, vector<128x512xf32>, vector<1x512xf32> -> vector<1x512xf32>
    %113 = arith.addf %111, %112 : vector<1x512xf32>
    %114 = vector.extract_strided_slice %113 {offsets = [0, 0], sizes = [1, 128], strides = [1, 1]} : vector<1x512xf32> to vector<1x128xf32>
    %cst_28 = arith.constant 5.000000e-01 : f32
    %115 = vector.broadcast %cst_28 : f32 to vector<1x128xf32>
    %116 = arith.mulf %115, %114 : vector<1x128xf32>
    %117 = math.tanh %116 : vector<1x128xf32>
    %cst_29 = arith.constant 1.000000e+00 : f32
    %118 = vector.broadcast %cst_29 : f32 to vector<1x128xf32>
    %119 = arith.addf %117, %118 : vector<1x128xf32>
    %cst_30 = arith.constant 5.000000e-01 : f32
    %120 = vector.broadcast %cst_30 : f32 to vector<1x128xf32>
    %121 = arith.mulf %120, %119 : vector<1x128xf32>
    %122 = vector.extract_strided_slice %113 {offsets = [0, 128], sizes = [1, 128], strides = [1, 1]} : vector<1x512xf32> to vector<1x128xf32>
    %cst_31 = arith.constant 5.000000e-01 : f32
    %123 = vector.broadcast %cst_31 : f32 to vector<1x128xf32>
    %124 = arith.mulf %123, %122 : vector<1x128xf32>
    %125 = math.tanh %124 : vector<1x128xf32>
    %cst_32 = arith.constant 1.000000e+00 : f32
    %126 = vector.broadcast %cst_32 : f32 to vector<1x128xf32>
    %127 = arith.addf %125, %126 : vector<1x128xf32>
    %cst_33 = arith.constant 5.000000e-01 : f32
    %128 = vector.broadcast %cst_33 : f32 to vector<1x128xf32>
    %129 = arith.mulf %128, %127 : vector<1x128xf32>
    %130 = vector.extract_strided_slice %113 {offsets = [0, 256], sizes = [1, 128], strides = [1, 1]} : vector<1x512xf32> to vector<1x128xf32>
    %131 = math.tanh %130 : vector<1x128xf32>
    %132 = vector.extract_strided_slice %113 {offsets = [0, 384], sizes = [1, 128], strides = [1, 1]} : vector<1x512xf32> to vector<1x128xf32>
    %cst_34 = arith.constant 5.000000e-01 : f32
    %133 = vector.broadcast %cst_34 : f32 to vector<1x128xf32>
    %134 = arith.mulf %133, %132 : vector<1x128xf32>
    %135 = math.tanh %134 : vector<1x128xf32>
    %cst_35 = arith.constant 1.000000e+00 : f32
    %136 = vector.broadcast %cst_35 : f32 to vector<1x128xf32>
    %137 = arith.addf %135, %136 : vector<1x128xf32>
    %cst_36 = arith.constant 5.000000e-01 : f32
    %138 = vector.broadcast %cst_36 : f32 to vector<1x128xf32>
    %139 = arith.mulf %138, %137 : vector<1x128xf32>
    %140 = arith.mulf %129, %107 : vector<1x128xf32>
    %141 = arith.mulf %121, %131 : vector<1x128xf32>
    %142 = arith.addf %140, %141 : vector<1x128xf32>
    %143 = math.tanh %142 : vector<1x128xf32>
    %144 = arith.mulf %139, %143 : vector<1x128xf32>
    %c1_37 = arith.constant 1 : index
    %c0_38 = arith.constant 0 : index
    %145 = vector.load %arg8[%c1_37, %c0_38] : memref<8x128xf32, #tpu.memory_space<vmem>>, vector<1x128xf32>
    tpu.vector_store %arg8[%c1_37, %c0_38], %144 {strides = array<i32>} : memref<8x128xf32, #tpu.memory_space<vmem>>, vector<1x128xf32>,
    %c2 = arith.constant 2 : index
    %c0_39 = arith.constant 0 : index
    %146 = vector.load %arg7[%c2, %c0_39] : memref<8x512xf32, #tpu.memory_space<vmem>>, vector<1x512xf32>
    %cst_40 = arith.constant dense<0.000000e+00> : vector<1x512xf32>
    %147 = tpu.matmul %144, %73, %cst_40 {dimension_numbers = #tpu.dot_dimension_numbers<[1], [0], [0], [1], [0, 0, 1, 1], [], []>} : vector<1x128xf32>, vector<128x512xf32>, vector<1x512xf32> -> vector<1x512xf32>
    %148 = arith.addf %146, %147 : vector<1x512xf32>
    %149 = vector.extract_strided_slice %148 {offsets = [0, 0], sizes = [1, 128], strides = [1, 1]} : vector<1x512xf32> to vector<1x128xf32>
    %cst_41 = arith.constant 5.000000e-01 : f32
    %150 = vector.broadcast %cst_41 : f32 to vector<1x128xf32>
    %151 = arith.mulf %150, %149 : vector<1x128xf32>
    %152 = math.tanh %151 : vector<1x128xf32>
    %cst_42 = arith.constant 1.000000e+00 : f32
    %153 = vector.broadcast %cst_42 : f32 to vector<1x128xf32>
    %154 = arith.addf %152, %153 : vector<1x128xf32>
    %cst_43 = arith.constant 5.000000e-01 : f32
    %155 = vector.broadcast %cst_43 : f32 to vector<1x128xf32>
    %156 = arith.mulf %155, %154 : vector<1x128xf32>
    %157 = vector.extract_strided_slice %148 {offsets = [0, 128], sizes = [1, 128], strides = [1, 1]} : vector<1x512xf32> to vector<1x128xf32>
    %cst_44 = arith.constant 5.000000e-01 : f32
    %158 = vector.broadcast %cst_44 : f32 to vector<1x128xf32>
    %159 = arith.mulf %158, %157 : vector<1x128xf32>
    %160 = math.tanh %159 : vector<1x128xf32>
    %cst_45 = arith.constant 1.000000e+00 : f32
    %161 = vector.broadcast %cst_45 : f32 to vector<1x128xf32>
    %162 = arith.addf %160, %161 : vector<1x128xf32>
    %cst_46 = arith.constant 5.000000e-01 : f32
    %163 = vector.broadcast %cst_46 : f32 to vector<1x128xf32>
    %164 = arith.mulf %163, %162 : vector<1x128xf32>
    %165 = vector.extract_strided_slice %148 {offsets = [0, 256], sizes = [1, 128], strides = [1, 1]} : vector<1x512xf32> to vector<1x128xf32>
    %166 = math.tanh %165 : vector<1x128xf32>
    %167 = vector.extract_strided_slice %148 {offsets = [0, 384], sizes = [1, 128], strides = [1, 1]} : vector<1x512xf32> to vector<1x128xf32>
    %cst_47 = arith.constant 5.000000e-01 : f32
    %168 = vector.broadcast %cst_47 : f32 to vector<1x128xf32>
    %169 = arith.mulf %168, %167 : vector<1x128xf32>
    %170 = math.tanh %169 : vector<1x128xf32>
    %cst_48 = arith.constant 1.000000e+00 : f32
    %171 = vector.broadcast %cst_48 : f32 to vector<1x128xf32>
    %172 = arith.addf %170, %171 : vector<1x128xf32>
    %cst_49 = arith.constant 5.000000e-01 : f32
    %173 = vector.broadcast %cst_49 : f32 to vector<1x128xf32>
    %174 = arith.mulf %173, %172 : vector<1x128xf32>
    %175 = arith.mulf %164, %142 : vector<1x128xf32>
    %176 = arith.mulf %156, %166 : vector<1x128xf32>
    %177 = arith.addf %175, %176 : vector<1x128xf32>
    %178 = math.tanh %177 : vector<1x128xf32>
    %179 = arith.mulf %174, %178 : vector<1x128xf32>
    %c2_50 = arith.constant 2 : index
    %c0_51 = arith.constant 0 : index
    %180 = vector.load %arg8[%c2_50, %c0_51] : memref<8x128xf32, #tpu.memory_space<vmem>>, vector<1x128xf32>
    tpu.vector_store %arg8[%c2_50, %c0_51], %179 {strides = array<i32>} : memref<8x128xf32, #tpu.memory_space<vmem>>, vector<1x128xf32>,
    %c3 = arith.constant 3 : index
    %c0_52 = arith.constant 0 : index
    %181 = vector.load %arg7[%c3, %c0_52] : memref<8x512xf32, #tpu.memory_space<vmem>>, vector<1x512xf32>
    %cst_53 = arith.constant dense<0.000000e+00> : vector<1x512xf32>
    %182 = tpu.matmul %179, %73, %cst_53 {dimension_numbers = #tpu.dot_dimension_numbers<[1], [0], [0], [1], [0, 0, 1, 1], [], []>} : vector<1x128xf32>, vector<128x512xf32>, vector<1x512xf32> -> vector<1x512xf32>
    %183 = arith.addf %181, %182 : vector<1x512xf32>
    %184 = vector.extract_strided_slice %183 {offsets = [0, 0], sizes = [1, 128], strides = [1, 1]} : vector<1x512xf32> to vector<1x128xf32>
    %cst_54 = arith.constant 5.000000e-01 : f32
    %185 = vector.broadcast %cst_54 : f32 to vector<1x128xf32>
    %186 = arith.mulf %185, %184 : vector<1x128xf32>
    %187 = math.tanh %186 : vector<1x128xf32>
    %cst_55 = arith.constant 1.000000e+00 : f32
    %188 = vector.broadcast %cst_55 : f32 to vector<1x128xf32>
    %189 = arith.addf %187, %188 : vector<1x128xf32>
    %cst_56 = arith.constant 5.000000e-01 : f32
    %190 = vector.broadcast %cst_56 : f32 to vector<1x128xf32>
    %191 = arith.mulf %190, %189 : vector<1x128xf32>
    %192 = vector.extract_strided_slice %183 {offsets = [0, 128], sizes = [1, 128], strides = [1, 1]} : vector<1x512xf32> to vector<1x128xf32>
    %cst_57 = arith.constant 5.000000e-01 : f32
    %193 = vector.broadcast %cst_57 : f32 to vector<1x128xf32>
    %194 = arith.mulf %193, %192 : vector<1x128xf32>
    %195 = math.tanh %194 : vector<1x128xf32>
    %cst_58 = arith.constant 1.000000e+00 : f32
    %196 = vector.broadcast %cst_58 : f32 to vector<1x128xf32>
    %197 = arith.addf %195, %196 : vector<1x128xf32>
    %cst_59 = arith.constant 5.000000e-01 : f32
    %198 = vector.broadcast %cst_59 : f32 to vector<1x128xf32>
    %199 = arith.mulf %198, %197 : vector<1x128xf32>
    %200 = vector.extract_strided_slice %183 {offsets = [0, 256], sizes = [1, 128], strides = [1, 1]} : vector<1x512xf32> to vector<1x128xf32>
    %201 = math.tanh %200 : vector<1x128xf32>
    %202 = vector.extract_strided_slice %183 {offsets = [0, 384], sizes = [1, 128], strides = [1, 1]} : vector<1x512xf32> to vector<1x128xf32>
    %cst_60 = arith.constant 5.000000e-01 : f32
    %203 = vector.broadcast %cst_60 : f32 to vector<1x128xf32>
    %204 = arith.mulf %203, %202 : vector<1x128xf32>
    %205 = math.tanh %204 : vector<1x128xf32>
    %cst_61 = arith.constant 1.000000e+00 : f32
    %206 = vector.broadcast %cst_61 : f32 to vector<1x128xf32>
    %207 = arith.addf %205, %206 : vector<1x128xf32>
    %cst_62 = arith.constant 5.000000e-01 : f32
    %208 = vector.broadcast %cst_62 : f32 to vector<1x128xf32>
    %209 = arith.mulf %208, %207 : vector<1x128xf32>
    %210 = arith.mulf %199, %177 : vector<1x128xf32>
    %211 = arith.mulf %191, %201 : vector<1x128xf32>
    %212 = arith.addf %210, %211 : vector<1x128xf32>
    %213 = math.tanh %212 : vector<1x128xf32>
    %214 = arith.mulf %209, %213 : vector<1x128xf32>
    %c3_63 = arith.constant 3 : index
    %c0_64 = arith.constant 0 : index
    %215 = vector.load %arg8[%c3_63, %c0_64] : memref<8x128xf32, #tpu.memory_space<vmem>>, vector<1x128xf32>
    tpu.vector_store %arg8[%c3_63, %c0_64], %214 {strides = array<i32>} : memref<8x128xf32, #tpu.memory_space<vmem>>, vector<1x128xf32>,
    %c4 = arith.constant 4 : index
    %c0_65 = arith.constant 0 : index
    %216 = vector.load %arg7[%c4, %c0_65] : memref<8x512xf32, #tpu.memory_space<vmem>>, vector<1x512xf32>
    %cst_66 = arith.constant dense<0.000000e+00> : vector<1x512xf32>
    %217 = tpu.matmul %214, %73, %cst_66 {dimension_numbers = #tpu.dot_dimension_numbers<[1], [0], [0], [1], [0, 0, 1, 1], [], []>} : vector<1x128xf32>, vector<128x512xf32>, vector<1x512xf32> -> vector<1x512xf32>
    %218 = arith.addf %216, %217 : vector<1x512xf32>
    %219 = vector.extract_strided_slice %218 {offsets = [0, 0], sizes = [1, 128], strides = [1, 1]} : vector<1x512xf32> to vector<1x128xf32>
    %cst_67 = arith.constant 5.000000e-01 : f32
    %220 = vector.broadcast %cst_67 : f32 to vector<1x128xf32>
    %221 = arith.mulf %220, %219 : vector<1x128xf32>
    %222 = math.tanh %221 : vector<1x128xf32>
    %cst_68 = arith.constant 1.000000e+00 : f32
    %223 = vector.broadcast %cst_68 : f32 to vector<1x128xf32>
    %224 = arith.addf %222, %223 : vector<1x128xf32>
    %cst_69 = arith.constant 5.000000e-01 : f32
    %225 = vector.broadcast %cst_69 : f32 to vector<1x128xf32>
    %226 = arith.mulf %225, %224 : vector<1x128xf32>
    %227 = vector.extract_strided_slice %218 {offsets = [0, 128], sizes = [1, 128], strides = [1, 1]} : vector<1x512xf32> to vector<1x128xf32>
    %cst_70 = arith.constant 5.000000e-01 : f32
    %228 = vector.broadcast %cst_70 : f32 to vector<1x128xf32>
    %229 = arith.mulf %228, %227 : vector<1x128xf32>
    %230 = math.tanh %229 : vector<1x128xf32>
    %cst_71 = arith.constant 1.000000e+00 : f32
    %231 = vector.broadcast %cst_71 : f32 to vector<1x128xf32>
    %232 = arith.addf %230, %231 : vector<1x128xf32>
    %cst_72 = arith.constant 5.000000e-01 : f32
    %233 = vector.broadcast %cst_72 : f32 to vector<1x128xf32>
    %234 = arith.mulf %233, %232 : vector<1x128xf32>
    %235 = vector.extract_strided_slice %218 {offsets = [0, 256], sizes = [1, 128], strides = [1, 1]} : vector<1x512xf32> to vector<1x128xf32>
    %236 = math.tanh %235 : vector<1x128xf32>
    %237 = vector.extract_strided_slice %218 {offsets = [0, 384], sizes = [1, 128], strides = [1, 1]} : vector<1x512xf32> to vector<1x128xf32>
    %cst_73 = arith.constant 5.000000e-01 : f32
    %238 = vector.broadcast %cst_73 : f32 to vector<1x128xf32>
    %239 = arith.mulf %238, %237 : vector<1x128xf32>
    %240 = math.tanh %239 : vector<1x128xf32>
    %cst_74 = arith.constant 1.000000e+00 : f32
    %241 = vector.broadcast %cst_74 : f32 to vector<1x128xf32>
    %242 = arith.addf %240, %241 : vector<1x128xf32>
    %cst_75 = arith.constant 5.000000e-01 : f32
    %243 = vector.broadcast %cst_75 : f32 to vector<1x128xf32>
    %244 = arith.mulf %243, %242 : vector<1x128xf32>
    %245 = arith.mulf %234, %212 : vector<1x128xf32>
    %246 = arith.mulf %226, %236 : vector<1x128xf32>
    %247 = arith.addf %245, %246 : vector<1x128xf32>
    %248 = math.tanh %247 : vector<1x128xf32>
    %249 = arith.mulf %244, %248 : vector<1x128xf32>
    %c4_76 = arith.constant 4 : index
    %c0_77 = arith.constant 0 : index
    %250 = vector.load %arg8[%c4_76, %c0_77] : memref<8x128xf32, #tpu.memory_space<vmem>>, vector<1x128xf32>
    tpu.vector_store %arg8[%c4_76, %c0_77], %249 {strides = array<i32>} : memref<8x128xf32, #tpu.memory_space<vmem>>, vector<1x128xf32>,
    %c5 = arith.constant 5 : index
    %c0_78 = arith.constant 0 : index
    %251 = vector.load %arg7[%c5, %c0_78] : memref<8x512xf32, #tpu.memory_space<vmem>>, vector<1x512xf32>
    %cst_79 = arith.constant dense<0.000000e+00> : vector<1x512xf32>
    %252 = tpu.matmul %249, %73, %cst_79 {dimension_numbers = #tpu.dot_dimension_numbers<[1], [0], [0], [1], [0, 0, 1, 1], [], []>} : vector<1x128xf32>, vector<128x512xf32>, vector<1x512xf32> -> vector<1x512xf32>
    %253 = arith.addf %251, %252 : vector<1x512xf32>
    %254 = vector.extract_strided_slice %253 {offsets = [0, 0], sizes = [1, 128], strides = [1, 1]} : vector<1x512xf32> to vector<1x128xf32>
    %cst_80 = arith.constant 5.000000e-01 : f32
    %255 = vector.broadcast %cst_80 : f32 to vector<1x128xf32>
    %256 = arith.mulf %255, %254 : vector<1x128xf32>
    %257 = math.tanh %256 : vector<1x128xf32>
    %cst_81 = arith.constant 1.000000e+00 : f32
    %258 = vector.broadcast %cst_81 : f32 to vector<1x128xf32>
    %259 = arith.addf %257, %258 : vector<1x128xf32>
    %cst_82 = arith.constant 5.000000e-01 : f32
    %260 = vector.broadcast %cst_82 : f32 to vector<1x128xf32>
    %261 = arith.mulf %260, %259 : vector<1x128xf32>
    %262 = vector.extract_strided_slice %253 {offsets = [0, 128], sizes = [1, 128], strides = [1, 1]} : vector<1x512xf32> to vector<1x128xf32>
    %cst_83 = arith.constant 5.000000e-01 : f32
    %263 = vector.broadcast %cst_83 : f32 to vector<1x128xf32>
    %264 = arith.mulf %263, %262 : vector<1x128xf32>
    %265 = math.tanh %264 : vector<1x128xf32>
    %cst_84 = arith.constant 1.000000e+00 : f32
    %266 = vector.broadcast %cst_84 : f32 to vector<1x128xf32>
    %267 = arith.addf %265, %266 : vector<1x128xf32>
    %cst_85 = arith.constant 5.000000e-01 : f32
    %268 = vector.broadcast %cst_85 : f32 to vector<1x128xf32>
    %269 = arith.mulf %268, %267 : vector<1x128xf32>
    %270 = vector.extract_strided_slice %253 {offsets = [0, 256], sizes = [1, 128], strides = [1, 1]} : vector<1x512xf32> to vector<1x128xf32>
    %271 = math.tanh %270 : vector<1x128xf32>
    %272 = vector.extract_strided_slice %253 {offsets = [0, 384], sizes = [1, 128], strides = [1, 1]} : vector<1x512xf32> to vector<1x128xf32>
    %cst_86 = arith.constant 5.000000e-01 : f32
    %273 = vector.broadcast %cst_86 : f32 to vector<1x128xf32>
    %274 = arith.mulf %273, %272 : vector<1x128xf32>
    %275 = math.tanh %274 : vector<1x128xf32>
    %cst_87 = arith.constant 1.000000e+00 : f32
    %276 = vector.broadcast %cst_87 : f32 to vector<1x128xf32>
    %277 = arith.addf %275, %276 : vector<1x128xf32>
    %cst_88 = arith.constant 5.000000e-01 : f32
    %278 = vector.broadcast %cst_88 : f32 to vector<1x128xf32>
    %279 = arith.mulf %278, %277 : vector<1x128xf32>
    %280 = arith.mulf %269, %247 : vector<1x128xf32>
    %281 = arith.mulf %261, %271 : vector<1x128xf32>
    %282 = arith.addf %280, %281 : vector<1x128xf32>
    %283 = math.tanh %282 : vector<1x128xf32>
    %284 = arith.mulf %279, %283 : vector<1x128xf32>
    %c5_89 = arith.constant 5 : index
    %c0_90 = arith.constant 0 : index
    %285 = vector.load %arg8[%c5_89, %c0_90] : memref<8x128xf32, #tpu.memory_space<vmem>>, vector<1x128xf32>
    tpu.vector_store %arg8[%c5_89, %c0_90], %284 {strides = array<i32>} : memref<8x128xf32, #tpu.memory_space<vmem>>, vector<1x128xf32>,
    %c6 = arith.constant 6 : index
    %c0_91 = arith.constant 0 : index
    %286 = vector.load %arg7[%c6, %c0_91] : memref<8x512xf32, #tpu.memory_space<vmem>>, vector<1x512xf32>
    %cst_92 = arith.constant dense<0.000000e+00> : vector<1x512xf32>
    %287 = tpu.matmul %284, %73, %cst_92 {dimension_numbers = #tpu.dot_dimension_numbers<[1], [0], [0], [1], [0, 0, 1, 1], [], []>} : vector<1x128xf32>, vector<128x512xf32>, vector<1x512xf32> -> vector<1x512xf32>
    %288 = arith.addf %286, %287 : vector<1x512xf32>
    %289 = vector.extract_strided_slice %288 {offsets = [0, 0], sizes = [1, 128], strides = [1, 1]} : vector<1x512xf32> to vector<1x128xf32>
    %cst_93 = arith.constant 5.000000e-01 : f32
    %290 = vector.broadcast %cst_93 : f32 to vector<1x128xf32>
    %291 = arith.mulf %290, %289 : vector<1x128xf32>
    %292 = math.tanh %291 : vector<1x128xf32>
    %cst_94 = arith.constant 1.000000e+00 : f32
    %293 = vector.broadcast %cst_94 : f32 to vector<1x128xf32>
    %294 = arith.addf %292, %293 : vector<1x128xf32>
    %cst_95 = arith.constant 5.000000e-01 : f32
    %295 = vector.broadcast %cst_95 : f32 to vector<1x128xf32>
    %296 = arith.mulf %295, %294 : vector<1x128xf32>
    %297 = vector.extract_strided_slice %288 {offsets = [0, 128], sizes = [1, 128], strides = [1, 1]} : vector<1x512xf32> to vector<1x128xf32>
    %cst_96 = arith.constant 5.000000e-01 : f32
    %298 = vector.broadcast %cst_96 : f32 to vector<1x128xf32>
    %299 = arith.mulf %298, %297 : vector<1x128xf32>
    %300 = math.tanh %299 : vector<1x128xf32>
    %cst_97 = arith.constant 1.000000e+00 : f32
    %301 = vector.broadcast %cst_97 : f32 to vector<1x128xf32>
    %302 = arith.addf %300, %301 : vector<1x128xf32>
    %cst_98 = arith.constant 5.000000e-01 : f32
    %303 = vector.broadcast %cst_98 : f32 to vector<1x128xf32>
    %304 = arith.mulf %303, %302 : vector<1x128xf32>
    %305 = vector.extract_strided_slice %288 {offsets = [0, 256], sizes = [1, 128], strides = [1, 1]} : vector<1x512xf32> to vector<1x128xf32>
    %306 = math.tanh %305 : vector<1x128xf32>
    %307 = vector.extract_strided_slice %288 {offsets = [0, 384], sizes = [1, 128], strides = [1, 1]} : vector<1x512xf32> to vector<1x128xf32>
    %cst_99 = arith.constant 5.000000e-01 : f32
    %308 = vector.broadcast %cst_99 : f32 to vector<1x128xf32>
    %309 = arith.mulf %308, %307 : vector<1x128xf32>
    %310 = math.tanh %309 : vector<1x128xf32>
    %cst_100 = arith.constant 1.000000e+00 : f32
    %311 = vector.broadcast %cst_100 : f32 to vector<1x128xf32>
    %312 = arith.addf %310, %311 : vector<1x128xf32>
    %cst_101 = arith.constant 5.000000e-01 : f32
    %313 = vector.broadcast %cst_101 : f32 to vector<1x128xf32>
    %314 = arith.mulf %313, %312 : vector<1x128xf32>
    %315 = arith.mulf %304, %282 : vector<1x128xf32>
    %316 = arith.mulf %296, %306 : vector<1x128xf32>
    %317 = arith.addf %315, %316 : vector<1x128xf32>
    %318 = math.tanh %317 : vector<1x128xf32>
    %319 = arith.mulf %314, %318 : vector<1x128xf32>
    %c6_102 = arith.constant 6 : index
    %c0_103 = arith.constant 0 : index
    %320 = vector.load %arg8[%c6_102, %c0_103] : memref<8x128xf32, #tpu.memory_space<vmem>>, vector<1x128xf32>
    tpu.vector_store %arg8[%c6_102, %c0_103], %319 {strides = array<i32>} : memref<8x128xf32, #tpu.memory_space<vmem>>, vector<1x128xf32>,
    %c7 = arith.constant 7 : index
    %c0_104 = arith.constant 0 : index
    %321 = vector.load %arg7[%c7, %c0_104] : memref<8x512xf32, #tpu.memory_space<vmem>>, vector<1x512xf32>
    %cst_105 = arith.constant dense<0.000000e+00> : vector<1x512xf32>
    %322 = tpu.matmul %319, %73, %cst_105 {dimension_numbers = #tpu.dot_dimension_numbers<[1], [0], [0], [1], [0, 0, 1, 1], [], []>} : vector<1x128xf32>, vector<128x512xf32>, vector<1x512xf32> -> vector<1x512xf32>
    %323 = arith.addf %321, %322 : vector<1x512xf32>
    %324 = vector.extract_strided_slice %323 {offsets = [0, 0], sizes = [1, 128], strides = [1, 1]} : vector<1x512xf32> to vector<1x128xf32>
    %cst_106 = arith.constant 5.000000e-01 : f32
    %325 = vector.broadcast %cst_106 : f32 to vector<1x128xf32>
    %326 = arith.mulf %325, %324 : vector<1x128xf32>
    %327 = math.tanh %326 : vector<1x128xf32>
    %cst_107 = arith.constant 1.000000e+00 : f32
    %328 = vector.broadcast %cst_107 : f32 to vector<1x128xf32>
    %329 = arith.addf %327, %328 : vector<1x128xf32>
    %cst_108 = arith.constant 5.000000e-01 : f32
    %330 = vector.broadcast %cst_108 : f32 to vector<1x128xf32>
    %331 = arith.mulf %330, %329 : vector<1x128xf32>
    %332 = vector.extract_strided_slice %323 {offsets = [0, 128], sizes = [1, 128], strides = [1, 1]} : vector<1x512xf32> to vector<1x128xf32>
    %cst_109 = arith.constant 5.000000e-01 : f32
    %333 = vector.broadcast %cst_109 : f32 to vector<1x128xf32>
    %334 = arith.mulf %333, %332 : vector<1x128xf32>
    %335 = math.tanh %334 : vector<1x128xf32>
    %cst_110 = arith.constant 1.000000e+00 : f32
    %336 = vector.broadcast %cst_110 : f32 to vector<1x128xf32>
    %337 = arith.addf %335, %336 : vector<1x128xf32>
    %cst_111 = arith.constant 5.000000e-01 : f32
    %338 = vector.broadcast %cst_111 : f32 to vector<1x128xf32>
    %339 = arith.mulf %338, %337 : vector<1x128xf32>
    %340 = vector.extract_strided_slice %323 {offsets = [0, 256], sizes = [1, 128], strides = [1, 1]} : vector<1x512xf32> to vector<1x128xf32>
    %341 = math.tanh %340 : vector<1x128xf32>
    %342 = vector.extract_strided_slice %323 {offsets = [0, 384], sizes = [1, 128], strides = [1, 1]} : vector<1x512xf32> to vector<1x128xf32>
    %cst_112 = arith.constant 5.000000e-01 : f32
    %343 = vector.broadcast %cst_112 : f32 to vector<1x128xf32>
    %344 = arith.mulf %343, %342 : vector<1x128xf32>
    %345 = math.tanh %344 : vector<1x128xf32>
    %cst_113 = arith.constant 1.000000e+00 : f32
    %346 = vector.broadcast %cst_113 : f32 to vector<1x128xf32>
    %347 = arith.addf %345, %346 : vector<1x128xf32>
    %cst_114 = arith.constant 5.000000e-01 : f32
    %348 = vector.broadcast %cst_114 : f32 to vector<1x128xf32>
    %349 = arith.mulf %348, %347 : vector<1x128xf32>
    %350 = arith.mulf %339, %317 : vector<1x128xf32>
    %351 = arith.mulf %331, %341 : vector<1x128xf32>
    %352 = arith.addf %350, %351 : vector<1x128xf32>
    %353 = math.tanh %352 : vector<1x128xf32>
    %354 = arith.mulf %349, %353 : vector<1x128xf32>
    %c7_115 = arith.constant 7 : index
    %c0_116 = arith.constant 0 : index
    %355 = vector.load %arg8[%c7_115, %c0_116] : memref<8x128xf32, #tpu.memory_space<vmem>>, vector<1x128xf32>
    tpu.vector_store %arg8[%c7_115, %c0_116], %354 {strides = array<i32>} : memref<8x128xf32, #tpu.memory_space<vmem>>, vector<1x128xf32>,
    %c0_117 = arith.constant 0 : index
    %c0_118 = arith.constant 0 : index
    %356 = vector.load %arg8[%c0_117, %c0_118] : memref<8x128xf32, #tpu.memory_space<vmem>>, vector<8x128xf32>
    %c0_119 = arith.constant 0 : index
    %c0_120 = arith.constant 0 : index
    %357 = vector.load %arg4[%c0_119, %c0_120] : memref<128x128xf32, #tpu.memory_space<vmem>>, vector<128x128xf32>
    %cst_121 = arith.constant dense<0.000000e+00> : vector<8x128xf32>
    %358 = tpu.matmul %356, %357, %cst_121 {dimension_numbers = #tpu.dot_dimension_numbers<[1], [0], [0], [1], [0, 0, 1, 1], [], []>} : vector<8x128xf32>, vector<128x128xf32>, vector<8x128xf32> -> vector<8x128xf32>
    %c0_122 = arith.constant 0 : index
    %c0_123 = arith.constant 0 : index
    %359 = vector.load %arg5[%c0_122, %c0_123] : memref<1x128xf32, #tpu.memory_space<vmem>>, vector<1x128xf32>
    %360 = vector.broadcast %359 : vector<1x128xf32> to vector<8x128xf32>
    %361 = arith.addf %358, %360 : vector<8x128xf32>
    %cst_124 = arith.constant 5.000000e-01 : f32
    %362 = vector.broadcast %cst_124 : f32 to vector<8x128xf32>
    %363 = arith.mulf %362, %361 : vector<8x128xf32>
    %364 = math.tanh %363 : vector<8x128xf32>
    %cst_125 = arith.constant 1.000000e+00 : f32
    %365 = vector.broadcast %cst_125 : f32 to vector<8x128xf32>
    %366 = arith.addf %364, %365 : vector<8x128xf32>
    %cst_126 = arith.constant 5.000000e-01 : f32
    %367 = vector.broadcast %cst_126 : f32 to vector<8x128xf32>
    %368 = arith.mulf %367, %366 : vector<8x128xf32>
    %c0_127 = arith.constant 0 : index
    %c0_128 = arith.constant 0 : index
    %369 = vector.load %arg6[%c0_127, %c0_128] : memref<8x128xf32, #tpu.memory_space<vmem>>, vector<8x128xf32>
    tpu.vector_store %arg6[%c0_127, %c0_128], %368 {strides = array<i32>} : memref<8x128xf32, #tpu.memory_space<vmem>>, vector<8x128xf32>,
    return
  }
}

</mosaic_0001>

<llo_original>
// kernel: tpu_custom_call.1
$region0: #{tpu_custom_call.1}
  #allocation0 [shape = 'u32[]', space=smem, size = 0x4, offset = 0x4, fixed_abs, tag = 'smem constant byte address 0x4 - core index']
  #allocation1 [shape = 'u32[144,128]{1,0:T(1,128)}', space=vmem, size = 0x12000, scoped, tag = 'internal scratch']
  #allocation2 [shape = 'f32[8,512]{1,0:T(8,128)}', space=vmem, size = 0x4000, scoped, tag = 'scratch operand']
  #allocation3 [shape = 'f32[8,128]{1,0:T(8,128)}', space=vmem, size = 0x1000, scoped, tag = 'scratch operand']
  %s0 = inlined_call_operand.hbm [shape: s32[8,8], index: 0, kind: input, shape index: {}]
  %s1 = inlined_call_operand.hbm [shape: f32[128,512], index: 1, kind: input, shape index: {}]
  %s2 = inlined_call_operand.hbm [shape: f32[128,512], index: 2, kind: input, shape index: {}]
  %s3 = inlined_call_operand.vmem [shape: f32[1,512], index: 3, kind: input, shape index: {}]
  %s4 = inlined_call_operand.hbm [shape: f32[128,128], index: 4, kind: input, shape index: {}]
  %s5 = inlined_call_operand.vmem [shape: f32[1,128], index: 5, kind: input, shape index: {}]
  %s6 = inlined_call_operand.hbm [shape: f32[8,128], index: 6, kind: output, shape index: {}]
  %s7 = sld [smem:[#allocation0]]
  $region50: #{tpu_custom_call.1} parent=0
    _
  %s9 = ssub.s32 1, %s7
  %s10 = scalar_select 0, %s9, %s7
  $region1: #{tpu_custom_call.1} parent=0
    #allocation4 [shape = 'u8[4096]{0}', space=vmem, size = 0x1000, scoped, tag = 'input window, operand 0, single buffered']
    #allocation5 [shape = 's32[1]{0}', space=sflag, size = 0x4, scoped, tag = 'scoped memory for tpu_custom_call.1']
    #allocation6 [shape = 's32[1]{0}', space=sflag, size = 0x4, scoped, tag = 'scoped memory for tpu_custom_call.1']
    #allocation7 [shape = 'u8[262144]{0}', space=vmem, size = 0x40000, scoped, tag = 'input window, operand 1, single buffered']
    #allocation8 [shape = 's32[1]{0}', space=sflag, size = 0x4, scoped, tag = 'scoped memory for tpu_custom_call.1']
    #allocation9 [shape = 'u8[262144]{0}', space=vmem, size = 0x40000, scoped, tag = 'input window, operand 2, single buffered']
    #allocation10 [shape = 'u8[65536]{0}', space=vmem, size = 0x10000, scoped, tag = 'input window, operand 4, single buffered']
    #allocation11 [shape = 's32[1]{0}', space=sflag, size = 0x4, scoped, tag = 'scoped memory for tpu_custom_call.1']
    #allocation12 [shape = 'u8[4096]{0}', space=vmem, size = 0x1000, scoped, tag = 'output window, operand 0, single buffered']
    %11 = vsyncpa [#allocation5], 0
    %12 = vsyncpa [#allocation8], 0
    %13 = vsyncpa [#allocation11], 0
    %14 = vsyncpa [#allocation6], 0
    // Predicated region
    $region2: #{tpu_custom_call.1} parent=1 // pred_check
      _
    $region3: #{tpu_custom_call.1} parent=1 // pred_check_branch
      %16 = sbr.rel (0) target = $region5
    $region4: #{tpu_custom_call.1} parent=1 // pred_region
      %s18 = ssub.s32 128, 128
      %19 = vsyncadd [#allocation5], %s18
      %s21 = sshll.u32 [#allocation4], 4
      %s22 = int_to_ptr.vmem [resolvable:$true] %s21
      %24 = dma.hbm_to_vmem [thread:$0]  %s0, 128, %s22, [#allocation5]
    $region5: #{tpu_custom_call.1} parent=1 // pred_fallthru
      _
    // Predicated region
    $region6: #{tpu_custom_call.1} parent=1 // pred_check
      _
    $region7: #{tpu_custom_call.1} parent=1 // pred_check_branch
      %26 = sbr.rel (0) target = $region9
    $region8: #{tpu_custom_call.1} parent=1 // pred_region
      %s28 = ssub.s32 8192, 8192
      %29 = vsyncadd [#allocation8], %s28
      %s30 = sshll.u32 [#allocation7], 4
      %s31 = int_to_ptr.vmem [resolvable:$true] %s30
      %36 = dma.hbm_to_vmem [thread:$0]  %s1, 8192, %s31, [#allocation8], 512, 512, 32
    $region9: #{tpu_custom_call.1} parent=1 // pred_fallthru
      _
    // Predicated region
    $region10: #{tpu_custom_call.1} parent=1 // pred_check
      _
    $region11: #{tpu_custom_call.1} parent=1 // pred_check_branch
      %38 = sbr.rel (0) target = $region13
    $region12: #{tpu_custom_call.1} parent=1 // pred_region
      %s40 = ssub.s32 8192, 8192
      %41 = vsyncadd [#allocation8], %s40
      %s42 = sshll.u32 [#allocation9], 4
      %s43 = int_to_ptr.vmem [resolvable:$true] %s42
      %48 = dma.hbm_to_vmem [thread:$0]  %s2, 8192, %s43, [#allocation8], 512, 512, 32
    $region13: #{tpu_custom_call.1} parent=1 // pred_fallthru
      _
    // Predicated region
    $region14: #{tpu_custom_call.1} parent=1 // pred_check
      _
    $region15: #{tpu_custom_call.1} parent=1 // pred_check_branch
      %50 = sbr.rel (0) target = $region17
    $region16: #{tpu_custom_call.1} parent=1 // pred_region
      _
    $region17: #{tpu_custom_call.1} parent=1 // pred_fallthru
      _
    // Predicated region
    $region18: #{tpu_custom_call.1} parent=1 // pred_check
      _
    $region19: #{tpu_custom_call.1} parent=1 // pred_check_branch
      %52 = sbr.rel (0) target = $region21
    $region20: #{tpu_custom_call.1} parent=1 // pred_region
      %s54 = ssub.s32 2048, 2048
      %55 = vsyncadd [#allocation11], %s54
      %s56 = sshll.u32 [#allocation10], 4
      %s57 = int_to_ptr.vmem [resolvable:$true] %s56
      %62 = dma.hbm_to_vmem [thread:$0]  %s4, 2048, %s57, [#allocation11], 128, 128, 8
    $region21: #{tpu_custom_call.1} parent=1 // pred_fallthru
      _
    // Predicated region
    $region22: #{tpu_custom_call.1} parent=1 // pred_check
      _
    $region23: #{tpu_custom_call.1} parent=1 // pred_check_branch
      %64 = sbr.rel (0) target = $region25
    $region24: #{tpu_custom_call.1} parent=1 // pred_region
      _
    $region25: #{tpu_custom_call.1} parent=1 // pred_fallthru
      _
    // Predicated region
    $region26: #{tpu_custom_call.1} parent=1 // pred_check
      _
    $region27: #{tpu_custom_call.1} parent=1 // pred_check_branch
      %66 = sbr.rel (0) target = $region29
    $region28: #{tpu_custom_call.1} parent=1 // pred_region
      %67 = dma.done [#allocation5], 128
    $region29: #{tpu_custom_call.1} parent=1 // pred_fallthru
      _
    // Predicated region
    $region30: #{tpu_custom_call.1} parent=1 // pred_check
      _
    $region31: #{tpu_custom_call.1} parent=1 // pred_check_branch
      %69 = sbr.rel (0) target = $region33
    $region32: #{tpu_custom_call.1} parent=1 // pred_region
      %70 = dma.done [#allocation8], 8192
    $region33: #{tpu_custom_call.1} parent=1 // pred_fallthru
      _
    // Predicated region
    $region34: #{tpu_custom_call.1} parent=1 // pred_check
      _
    $region35: #{tpu_custom_call.1} parent=1 // pred_check_branch
      %72 = sbr.rel (0) target = $region37
    $region36: #{tpu_custom_call.1} parent=1 // pred_region
      %73 = dma.done [#allocation8], 8192
    $region37: #{tpu_custom_call.1} parent=1 // pred_fallthru
      _
    // Predicated region
    $region38: #{tpu_custom_call.1} parent=1 // pred_check
      _
    $region39: #{tpu_custom_call.1} parent=1 // pred_check_branch
      %75 = sbr.rel (0) target = $region41
    $region40: #{tpu_custom_call.1} parent=1 // pred_region
      %76 = dma.done [#allocation11], 2048
    $region41: #{tpu_custom_call.1} parent=1 // pred_fallthru
      _
    %v77 = vld [vmem:[#allocation4] sm:$0xff]
    %v78 = vlaneseq
    %v79 = vand.u32 %v78, 127
    %80 = vset.pattern.permute.xlu0 0
    %81 = vperm.xlu0 %80, %v77
    %v82 = vpop.permute.xlu0 %81
    %vm83 = vcmp.eq.s32.totalorder %v79, %v82
    %v84 = vsel %vm83, 1, 0
    %v85 = vcvt.s32.f32 %v84
    %v86 = vadd.f32 %v85, 0.0
    %v87 = vadd.s32 %v77, 3
    %88 = vset.pattern.permute.xlu0 1
    %89 = vperm.xlu0 %88, %v87
    %v90 = vpop.permute.xlu0 %89
    %vm91 = vcmp.eq.s32.totalorder %v79, %v90
    %v92 = vsel %vm91, 1, 0
    %v93 = vcvt.s32.f32 %v92
    %v94 = vadd.f32 %v86, %v93
    %v95 = vadd.s32 %v77, 6
    %96 = vset.pattern.permute.xlu0 2
    %97 = vperm.xlu0 %96, %v95
    %v98 = vpop.permute.xlu0 %97
    %vm99 = vcmp.eq.s32.totalorder %v79, %v98
    %v100 = vsel %vm99, 1, 0
    %v101 = vcvt.s32.f32 %v100
    %v102 = vadd.f32 %v94, %v101
    %v103 = vadd.s32 %v77, 9
    %104 = vset.pattern.permute.xlu0 3
    %105 = vperm.xlu0 %104, %v103
    %v106 = vpop.permute.xlu0 %105
    %vm107 = vcmp.eq.s32.totalorder %v79, %v106
    %v108 = vsel %vm107, 1, 0
    %v109 = vcvt.s32.f32 %v108
    %v110 = vadd.f32 %v102, %v109
    %v111 = vadd.s32 %v77, 12
    %112 = vset.pattern.permute.xlu0 4
    %113 = vperm.xlu0 %112, %v111
    %v114 = vpop.permute.xlu0 %113
    %vm115 = vcmp.eq.s32.totalorder %v79, %v114
    %v116 = vsel %vm115, 1, 0
    %v117 = vcvt.s32.f32 %v116
    %v118 = vadd.f32 %v110, %v117
    %v119 = vadd.s32 %v77, 15
    %120 = vset.pattern.permute.xlu0 5
    %121 = vperm.xlu0 %120, %v119
    %v122 = vpop.permute.xlu0 %121
    %vm123 = vcmp.eq.s32.totalorder %v79, %v122
    %v124 = vsel %vm123, 1, 0
    %v125 = vcvt.s32.f32 %v124
    %v126 = vadd.f32 %v118, %v125
    %v127 = vadd.s32 %v77, 18
    %128 = vset.pattern.permute.xlu0 6
    %129 = vperm.xlu0 %128, %v127
    %v130 = vpop.permute.xlu0 %129
    %vm131 = vcmp.eq.s32.totalorder %v79, %v130
    %v132 = vsel %vm131, 1, 0
    %v133 = vcvt.s32.f32 %v132
    %v134 = vadd.f32 %v126, %v133
    %v135 = vadd.s32 %v77, 21
    %136 = vset.pattern.permute.xlu0 7
    %137 = vperm.xlu0 %136, %v135
    %v138 = vpop.permute.xlu0 %137
    %vm139 = vcmp.eq.s32.totalorder %v79, %v138
    %v140 = vsel %vm139, 1, 0
    %v141 = vcvt.s32.f32 %v140
    %v142 = vadd.f32 %v134, %v141
    %v143 = vld [vmem:[#allocation7] sm:$0xff]
    %v144 = vld [vmem:[#allocation7 + $0x8] sm:$0xff]
    %v145 = vld [vmem:[#allocation7 + $0x10] sm:$0xff]
    %v146 = vld [vmem:[#allocation7 + $0x18] sm:$0xff]
    %v147 = vld [vmem:[#allocation7 + $0x20] sm:$0xff]
    %v148 = vld [vmem:[#allocation7 + $0x28] sm:$0xff]
    %v149 = vld [vmem:[#allocation7 + $0x30] sm:$0xff]
    %v150 = vld [vmem:[#allocation7 + $0x38] sm:$0xff]
    %v151 = vld [vmem:[#allocation7 + $0x40] sm:$0xff]
    %v152 = vld [vmem:[#allocation7 + $0x48] sm:$0xff]
    %v153 = vld [vmem:[#allocation7 + $0x50] sm:$0xff]
    %v154 = vld [vmem:[#allocation7 + $0x58] sm:$0xff]
    %v155 = vld [vmem:[#allocation7 + $0x60] sm:$0xff]
    %v156 = vld [vmem:[#allocation7 + $0x68] sm:$0xff]
    %v157 = vld [vmem:[#allocation7 + $0x70] sm:$0xff]
    %v158 = vld [vmem:[#allocation7 + $0x78] sm:$0xff]
    %v159 = vld [vmem:[#allocation7 + $0x80] sm:$0xff]
    %v160 = vld [vmem:[#allocation7 + $0x88] sm:$0xff]
    %v161 = vld [vmem:[#allocation7 + $0x90] sm:$0xff]
    %v162 = vld [vmem:[#allocation7 + $0x98] sm:$0xff]
    %v163 = vld [vmem:[#allocation7 + $0xa0] sm:$0xff]
    %v164 = vld [vmem:[#allocation7 + $0xa8] sm:$0xff]
    %v165 = vld [vmem:[#allocation7 + $0xb0] sm:$0xff]
    %v166 = vld [vmem:[#allocation7 + $0xb8] sm:$0xff]
    %v167 = vld [vmem:[#allocation7 + $0xc0] sm:$0xff]
    %v168 = vld [vmem:[#allocation7 + $0xc8] sm:$0xff]
    %v169 = vld [vmem:[#allocation7 + $0xd0] sm:$0xff]
    %v170 = vld [vmem:[#allocation7 + $0xd8] sm:$0xff]
    %v171 = vld [vmem:[#allocation7 + $0xe0] sm:$0xff]
    %v172 = vld [vmem:[#allocation7 + $0xe8] sm:$0xff]
    %v173 = vld [vmem:[#allocation7 + $0xf0] sm:$0xff]
    %v174 = vld [vmem:[#allocation7 + $0xf8] sm:$0xff]
    %v175 = vld [vmem:[#allocation7 + $0x100] sm:$0xff]
    %v176 = vld [vmem:[#allocation7 + $0x108] sm:$0xff]
    %v177 = vld [vmem:[#allocation7 + $0x110] sm:$0xff]
    %v178 = vld [vmem:[#allocation7 + $0x118] sm:$0xff]
    %v179 = vld [vmem:[#allocation7 + $0x120] sm:$0xff]
    %v180 = vld [vmem:[#allocation7 + $0x128] sm:$0xff]
    %v181 = vld [vmem:[#allocation7 + $0x130] sm:$0xff]
    %v182 = vld [vmem:[#allocation7 + $0x138] sm:$0xff]
    %v183 = vld [vmem:[#allocation7 + $0x140] sm:$0xff]
    %v184 = vld [vmem:[#allocation7 + $0x148] sm:$0xff]
    %v185 = vld [vmem:[#allocation7 + $0x150] sm:$0xff]
    %v186 = vld [vmem:[#allocation7 + $0x158] sm:$0xff]
    %v187 = vld [vmem:[#allocation7 + $0x160] sm:$0xff]
    %v188 = vld [vmem:[#allocation7 + $0x168] sm:$0xff]
    %v189 = vld [vmem:[#allocation7 + $0x170] sm:$0xff]
    %v190 = vld [vmem:[#allocation7 + $0x178] sm:$0xff]
    %v191 = vld [vmem:[#allocation7 + $0x180] sm:$0xff]
    %v192 = vld [vmem:[#allocation7 + $0x188] sm:$0xff]
    %v193 = vld [vmem:[#allocation7 + $0x190] sm:$0xff]
    %v194 = vld [vmem:[#allocation7 + $0x198] sm:$0xff]
    %v195 = vld [vmem:[#allocation7 + $0x1a0] sm:$0xff]
    %v196 = vld [vmem:[#allocation7 + $0x1a8] sm:$0xff]
    %v197 = vld [vmem:[#allocation7 + $0x1b0] sm:$0xff]
    %v198 = vld [vmem:[#allocation7 + $0x1b8] sm:$0xff]
    %v199 = vld [vmem:[#allocation7 + $0x1c0] sm:$0xff]
    %v200 = vld [vmem:[#allocation7 + $0x1c8] sm:$0xff]
    %v201 = vld [vmem:[#allocation7 + $0x1d0] sm:$0xff]
    %v202 = vld [vmem:[#allocation7 + $0x1d8] sm:$0xff]
    %v203 = vld [vmem:[#allocation7 + $0x1e0] sm:$0xff]
    %v204 = vld [vmem:[#allocation7 + $0x1e8] sm:$0xff]
    %v205 = vld [vmem:[#allocation7 + $0x1f0] sm:$0xff]
    %v206 = vld [vmem:[#allocation7 + $0x1f8] sm:$0xff]
    %v207 = vld [vmem:[%s3] sm:$0xf]
    %v209 = vlaneseq
    %v210 = vshrl.u32 %v209, 7
    %v211 = vsub.s32 0, %v210
    %v212 = vrot.slane %v207, %v211
    %v213 = vlaneseq
    %v214 = vshrl.u32 %v213, 7
    %v215 = vsub.s32 1, %v214
    %v216 = vrot.slane %v207, %v215
    %v217 = vlaneseq
    %v218 = vshrl.u32 %v217, 7
    %v219 = vsub.s32 2, %v218
    %v220 = vrot.slane %v207, %v219
    %v221 = vlaneseq
    %v222 = vshrl.u32 %v221, 7
    %v223 = vsub.s32 3, %v222
    %v224 = vrot.slane %v207, %v223
    %229 = vmatprep.subr.mxu0 %v204
    %230 = vmatpush1.msra.mxu0 %v203
    %231 = vmatprep.subr.mxu0 %v200
    %232 = vmatpush1.msra.mxu0 %v199
    %233 = vmatprep.subr.mxu0 %v196
    %234 = vmatpush1.msra.mxu0 %v195
    %235 = vmatprep.subr.mxu0 %v192
    %236 = vmatpush1.msra.mxu0 %v191
    %237 = vmatprep.subr.mxu0 %v188
    %238 = vmatpush1.msra.mxu0 %v187
    %239 = vmatprep.subr.mxu0 %v184
    %240 = vmatpush1.msra.mxu0 %v183
    %241 = vmatprep.subr.mxu0 %v180
    %242 = vmatpush1.msra.mxu0 %v179
    %243 = vmatprep.subr.mxu0 %v176
    %244 = vmatpush1.msra.mxu0 %v175
    %245 = vmatprep.subr.mxu0 %v172
    %246 = vmatpush1.msra.mxu0 %v171
    %247 = vmatprep.subr.mxu0 %v168
    %248 = vmatpush1.msra.mxu0 %v167
    %249 = vmatprep.subr.mxu0 %v164
    %250 = vmatpush1.msra.mxu0 %v163
    %251 = vmatprep.subr.mxu0 %v160
    %252 = vmatpush1.msra.mxu0 %v159
    %253 = vmatprep.subr.mxu0 %v156
    %254 = vmatpush1.msra.mxu0 %v155
    %255 = vmatprep.subr.mxu0 %v152
    %256 = vmatpush1.msra.mxu0 %v151
    %257 = vmatprep.subr.mxu0 %v148
    %258 = vmatpush1.msra.mxu0 %v147
    %259 = vmatprep.subr.mxu0 %v144
    %260 = vmatpush1.msra.mxu0 %v143
    %261 = vmatprep.subr.mxu0 0.0
    %262 = vmatpush2.msra.mxu0 0.0
    %263 = vmatprep.subr.mxu0 0.0
    %264 = vmatpush2.msra.mxu0 0.0
    %265 = vmatprep.subr.mxu0 0.0
    %266 = vmatpush2.msra.mxu0 0.0
    %267 = vmatprep.subr.mxu0 0.0
    %268 = vmatpush2.msra.mxu0 0.0
    %269 = vmatprep.subr.mxu0 0.0
    %270 = vmatpush2.msra.mxu0 0.0
    %271 = vmatprep.subr.mxu0 0.0
    %272 = vmatpush2.msra.mxu0 0.0
    %273 = vmatprep.subr.mxu0 0.0
    %274 = vmatpush2.msra.mxu0 0.0
    %275 = vmatprep.subr.mxu0 0.0
    %276 = vmatpush2.msra.mxu0 0.0
    %277 = vmatprep.subr.mxu0 0.0
    %278 = vmatpush2.msra.mxu0 0.0
    %279 = vmatprep.subr.mxu0 0.0
    %280 = vmatpush2.msra.mxu0 0.0
    %281 = vmatprep.subr.mxu0 0.0
    %282 = vmatpush2.msra.mxu0 0.0
    %283 = vmatprep.subr.mxu0 0.0
    %284 = vmatpush2.msra.mxu0 0.0
    %285 = vmatprep.subr.mxu0 0.0
    %286 = vmatpush2.msra.mxu0 0.0
    %287 = vmatprep.subr.mxu0 0.0
    %288 = vmatpush2.msra.mxu0 0.0
    %289 = vmatprep.subr.mxu0 0.0
    %290 = vmatpush2.msra.mxu0 0.0
    %291 = vmatprep.subr.mxu0 0.0
    %292 = vmatpush2.msra.mxu0 0.0
    %293 = vmatprep.mubr.f32.mxu0 0.0
    %294 = vmatmul.mubr.f32.gmra.mxu0 %v142
    %v295 = vpop.f32.mrf.mxu0
    %v296 = vadd.f32 %v212, %v295
    %v297 = vpop.f32.mrf.mxu0
    %v298 = vadd.f32 %v216, %v297
    %299 = vdwg.mxu0
    %300 = vmatprep.subr.mxu0 %v206
    %301 = vmatpush1.msra.mxu0 %v205
    %302 = vmatprep.subr.mxu0 %v202
    %303 = vmatpush1.msra.mxu0 %v201
    %304 = vmatprep.subr.mxu0 %v198
    %305 = vmatpush1.msra.mxu0 %v197
    %306 = vmatprep.subr.mxu0 %v194
    %307 = vmatpush1.msra.mxu0 %v193
    %308 = vmatprep.subr.mxu0 %v190
    %309 = vmatpush1.msra.mxu0 %v189
    %310 = vmatprep.subr.mxu0 %v186
    %311 = vmatpush1.msra.mxu0 %v185
    %312 = vmatprep.subr.mxu0 %v182
    %313 = vmatpush1.msra.mxu0 %v181
    %314 = vmatprep.subr.mxu0 %v178
    %315 = vmatpush1.msra.mxu0 %v177
    %316 = vmatprep.subr.mxu0 %v174
    %317 = vmatpush1.msra.mxu0 %v173
    %318 = vmatprep.subr.mxu0 %v170
    %319 = vmatpush1.msra.mxu0 %v169
    %320 = vmatprep.subr.mxu0 %v166
    %321 = vmatpush1.msra.mxu0 %v165
    %322 = vmatprep.subr.mxu0 %v162
    %323 = vmatpush1.msra.mxu0 %v161
    %324 = vmatprep.subr.mxu0 %v158
    %325 = vmatpush1.msra.mxu0 %v157
    %326 = vmatprep.subr.mxu0 %v154
    %327 = vmatpush1.msra.mxu0 %v153
    %328 = vmatprep.subr.mxu0 %v150
    %329 = vmatpush1.msra.mxu0 %v149
    %330 = vmatprep.subr.mxu0 %v146
    %331 = vmatpush1.msra.mxu0 %v145
    %332 = vmatprep.subr.mxu0 0.0
    %333 = vmatpush2.msra.mxu0 0.0
    %334 = vmatprep.subr.mxu0 0.0
    %335 = vmatpush2.msra.mxu0 0.0
    %336 = vmatprep.subr.mxu0 0.0
    %337 = vmatpush2.msra.mxu0 0.0
    %338 = vmatprep.subr.mxu0 0.0
    %339 = vmatpush2.msra.mxu0 0.0
    %340 = vmatprep.subr.mxu0 0.0
    %341 = vmatpush2.msra.mxu0 0.0
    %342 = vmatprep.subr.mxu0 0.0
    %343 = vmatpush2.msra.mxu0 0.0
    %344 = vmatprep.subr.mxu0 0.0
    %345 = vmatpush2.msra.mxu0 0.0
    %346 = vmatprep.subr.mxu0 0.0
    %347 = vmatpush2.msra.mxu0 0.0
    %348 = vmatprep.subr.mxu0 0.0
    %349 = vmatpush2.msra.mxu0 0.0
    %350 = vmatprep.subr.mxu0 0.0
    %351 = vmatpush2.msra.mxu0 0.0
    %352 = vmatprep.subr.mxu0 0.0
    %353 = vmatpush2.msra.mxu0 0.0
    %354 = vmatprep.subr.mxu0 0.0
    %355 = vmatpush2.msra.mxu0 0.0
    %356 = vmatprep.subr.mxu0 0.0
    %357 = vmatpush2.msra.mxu0 0.0
    %358 = vmatprep.subr.mxu0 0.0
    %359 = vmatpush2.msra.mxu0 0.0
    %360 = vmatprep.subr.mxu0 0.0
    %361 = vmatpush2.msra.mxu0 0.0
    %362 = vmatprep.subr.mxu0 0.0
    %363 = vmatpush2.msra.mxu0 0.0
    %364 = vmatprep.mubr.f32.mxu0 0.0
    %365 = vmatmul.mubr.f32.gmra.mxu0 %v142
    %v366 = vpop.f32.mrf.mxu0
    %v367 = vadd.f32 %v220, %v366
    %v368 = vpop.f32.mrf.mxu0
    %v369 = vadd.f32 %v224, %v368
    %370 = vdwg.mxu0
    %371 = vst [vmem:[#allocation2] sm:$0xff] %v296
    %372 = vst [vmem:[#allocation2 + $0x8] sm:$0xff] %v298
    %373 = vst [vmem:[#allocation2 + $0x10] sm:$0xff] %v367
    %374 = vst [vmem:[#allocation2 + $0x18] sm:$0xff] %v369
    %v375 = vld [vmem:[#allocation9] sm:$0xff]
    %v376 = vld [vmem:[#allocation9 + $0x8] sm:$0xff]
    %v377 = vld [vmem:[#allocation9 + $0x10] sm:$0xff]
    %v378 = vld [vmem:[#allocation9 + $0x18] sm:$0xff]
    %v379 = vld [vmem:[#allocation9 + $0x20] sm:$0xff]
    %v380 = vld [vmem:[#allocation9 + $0x28] sm:$0xff]
    %v381 = vld [vmem:[#allocation9 + $0x30] sm:$0xff]
    %v382 = vld [vmem:[#allocation9 + $0x38] sm:$0xff]
    %v383 = vld [vmem:[#allocation9 + $0x40] sm:$0xff]
    %v384 = vld [vmem:[#allocation9 + $0x48] sm:$0xff]
    %v385 = vld [vmem:[#allocation9 + $0x50] sm:$0xff]
    %v386 = vld [vmem:[#allocation9 + $0x58] sm:$0xff]
    %v387 = vld [vmem:[#allocation9 + $0x60] sm:$0xff]
    %v388 = vld [vmem:[#allocation9 + $0x68] sm:$0xff]
    %v389 = vld [vmem:[#allocation9 + $0x70] sm:$0xff]
    %v390 = vld [vmem:[#allocation9 + $0x78] sm:$0xff]
    %v391 = vld [vmem:[#allocation9 + $0x80] sm:$0xff]
    %v392 = vld [vmem:[#allocation9 + $0x88] sm:$0xff]
    %v393 = vld [vmem:[#allocation9 + $0x90] sm:$0xff]
    %v394 = vld [vmem:[#allocation9 + $0x98] sm:$0xff]
    %v395 = vld [vmem:[#allocation9 + $0xa0] sm:$0xff]
    %v396 = vld [vmem:[#allocation9 + $0xa8] sm:$0xff]
    %v397 = vld [vmem:[#allocation9 + $0xb0] sm:$0xff]
    %v398 = vld [vmem:[#allocation9 + $0xb8] sm:$0xff]
    %v399 = vld [vmem:[#allocation9 + $0xc0] sm:$0xff]
    %v400 = vld [vmem:[#allocation9 + $0xc8] sm:$0xff]
    %v401 = vld [vmem:[#allocation9 + $0xd0] sm:$0xff]
    %v402 = vld [vmem:[#allocation9 + $0xd8] sm:$0xff]
    %v403 = vld [vmem:[#allocation9 + $0xe0] sm:$0xff]
    %v404 = vld [vmem:[#allocation9 + $0xe8] sm:$0xff]
    %v405 = vld [vmem:[#allocation9 + $0xf0] sm:$0xff]
    %v406 = vld [vmem:[#allocation9 + $0xf8] sm:$0xff]
    %v407 = vld [vmem:[#allocation9 + $0x100] sm:$0xff]
    %v408 = vld [vmem:[#allocation9 + $0x108] sm:$0xff]
    %v409 = vld [vmem:[#allocation9 + $0x110] sm:$0xff]
    %v410 = vld [vmem:[#allocation9 + $0x118] sm:$0xff]
    %v411 = vld [vmem:[#allocation9 + $0x120] sm:$0xff]
    %v412 = vld [vmem:[#allocation9 + $0x128] sm:$0xff]
    %v413 = vld [vmem:[#allocation9 + $0x130] sm:$0xff]
    %v414 = vld [vmem:[#allocation9 + $0x138] sm:$0xff]
    %v415 = vld [vmem:[#allocation9 + $0x140] sm:$0xff]
    %v416 = vld [vmem:[#allocation9 + $0x148] sm:$0xff]
    %v417 = vld [vmem:[#allocation9 + $0x150] sm:$0xff]
    %v418 = vld [vmem:[#allocation9 + $0x158] sm:$0xff]
    %v419 = vld [vmem:[#allocation9 + $0x160] sm:$0xff]
    %v420 = vld [vmem:[#allocation9 + $0x168] sm:$0xff]
    %v421 = vld [vmem:[#allocation9 + $0x170] sm:$0xff]
    %v422 = vld [vmem:[#allocation9 + $0x178] sm:$0xff]
    %v423 = vld [vmem:[#allocation9 + $0x180] sm:$0xff]
    %v424 = vld [vmem:[#allocation9 + $0x188] sm:$0xff]
    %v425 = vld [vmem:[#allocation9 + $0x190] sm:$0xff]
    %v426 = vld [vmem:[#allocation9 + $0x198] sm:$0xff]
    %v427 = vld [vmem:[#allocation9 + $0x1a0] sm:$0xff]
    %v428 = vld [vmem:[#allocation9 + $0x1a8] sm:$0xff]
    %v429 = vld [vmem:[#allocation9 + $0x1b0] sm:$0xff]
    %v430 = vld [vmem:[#allocation9 + $0x1b8] sm:$0xff]
    %v431 = vld [vmem:[#allocation9 + $0x1c0] sm:$0xff]
    %v432 = vld [vmem:[#allocation9 + $0x1c8] sm:$0xff]
    %v433 = vld [vmem:[#allocation9 + $0x1d0] sm:$0xff]
    %v434 = vld [vmem:[#allocation9 + $0x1d8] sm:$0xff]
    %v435 = vld [vmem:[#allocation9 + $0x1e0] sm:$0xff]
    %v436 = vld [vmem:[#allocation9 + $0x1e8] sm:$0xff]
    %v437 = vld [vmem:[#allocation9 + $0x1f0] sm:$0xff]
    %v438 = vld [vmem:[#allocation9 + $0x1f8] sm:$0xff]
    %v439 = vld [vmem:[#allocation2] ss:$8 sm:$0xf]
    %440 = vmatprep.subr.mxu0 %v436
    %441 = vmatpush1.msra.mxu0 %v435
    %442 = vmatprep.subr.mxu0 %v432
    %443 = vmatpush1.msra.mxu0 %v431
    %444 = vmatprep.subr.mxu0 %v428
    %445 = vmatpush1.msra.mxu0 %v427
    %446 = vmatprep.subr.mxu0 %v424
    %447 = vmatpush1.msra.mxu0 %v423
    %448 = vmatprep.subr.mxu0 %v420
    %449 = vmatpush1.msra.mxu0 %v419
    %450 = vmatprep.subr.mxu0 %v416
    %451 = vmatpush1.msra.mxu0 %v415
    %452 = vmatprep.subr.mxu0 %v412
    %453 = vmatpush1.msra.mxu0 %v411
    %454 = vmatprep.subr.mxu0 %v408
    %455 = vmatpush1.msra.mxu0 %v407
    %456 = vmatprep.subr.mxu0 %v404
    %457 = vmatpush1.msra.mxu0 %v403
    %458 = vmatprep.subr.mxu0 %v400
    %459 = vmatpush1.msra.mxu0 %v399
    %460 = vmatprep.subr.mxu0 %v396
    %461 = vmatpush1.msra.mxu0 %v395
    %462 = vmatprep.subr.mxu0 %v392
    %463 = vmatpush1.msra.mxu0 %v391
    %464 = vmatprep.subr.mxu0 %v388
    %465 = vmatpush1.msra.mxu0 %v387
    %466 = vmatprep.subr.mxu0 %v384
    %467 = vmatpush1.msra.mxu0 %v383
    %468 = vmatprep.subr.mxu0 %v380
    %469 = vmatpush1.msra.mxu0 %v379
    %470 = vmatprep.subr.mxu0 %v376
    %471 = vmatpush1.msra.mxu0 %v375
    %472 = vmatprep.subr.mxu0 0.0
    %473 = vmatpush2.msra.mxu0 0.0
    %474 = vmatprep.subr.mxu0 0.0
    %475 = vmatpush2.msra.mxu0 0.0
    %476 = vmatprep.subr.mxu0 0.0
    %477 = vmatpush2.msra.mxu0 0.0
    %478 = vmatprep.subr.mxu0 0.0
    %479 = vmatpush2.msra.mxu0 0.0
    %480 = vmatprep.subr.mxu0 0.0
    %481 = vmatpush2.msra.mxu0 0.0
    %482 = vmatprep.subr.mxu0 0.0
    %483 = vmatpush2.msra.mxu0 0.0
    %484 = vmatprep.subr.mxu0 0.0
    %485 = vmatpush2.msra.mxu0 0.0
    %486 = vmatprep.subr.mxu0 0.0
    %487 = vmatpush2.msra.mxu0 0.0
    %488 = vmatprep.subr.mxu0 0.0
    %489 = vmatpush2.msra.mxu0 0.0
    %490 = vmatprep.subr.mxu0 0.0
    %491 = vmatpush2.msra.mxu0 0.0
    %492 = vmatprep.subr.mxu0 0.0
    %493 = vmatpush2.msra.mxu0 0.0
    %494 = vmatprep.subr.mxu0 0.0
    %495 = vmatpush2.msra.mxu0 0.0
    %496 = vmatprep.subr.mxu0 0.0
    %497 = vmatpush2.msra.mxu0 0.0
    %498 = vmatprep.subr.mxu0 0.0
    %499 = vmatpush2.msra.mxu0 0.0
    %500 = vmatprep.subr.mxu0 0.0
    %501 = vmatpush2.msra.mxu0 0.0
    %502 = vmatprep.subr.mxu0 0.0
    %503 = vmatpush2.msra.mxu0 0.0
    %504 = vmatprep.mubr.f32.mxu0 0.0
    %505 = vmatmul.mubr.f32.gmra.mxu0 0.0
    %v506 = vpop.f32.mrf.mxu0
    %v507 = vadd.f32 0.0, %v506
    %v508 = vpop.f32.mrf.mxu0
    %v509 = vadd.f32 0.0, %v508
    %510 = vdwg.mxu0
    %511 = vmatprep.subr.mxu0 %v438
    %512 = vmatpush1.msra.mxu0 %v437
    %513 = vmatprep.subr.mxu0 %v434
    %514 = vmatpush1.msra.mxu0 %v433
    %515 = vmatprep.subr.mxu0 %v430
    %516 = vmatpush1.msra.mxu0 %v429
    %517 = vmatprep.subr.mxu0 %v426
    %518 = vmatpush1.msra.mxu0 %v425
    %519 = vmatprep.subr.mxu0 %v422
    %520 = vmatpush1.msra.mxu0 %v421
    %521 = vmatprep.subr.mxu0 %v418
    %522 = vmatpush1.msra.mxu0 %v417
    %523 = vmatprep.subr.mxu0 %v414
    %524 = vmatpush1.msra.mxu0 %v413
    %525 = vmatprep.subr.mxu0 %v410
    %526 = vmatpush1.msra.mxu0 %v409
    %527 = vmatprep.subr.mxu0 %v406
    %528 = vmatpush1.msra.mxu0 %v405
    %529 = vmatprep.subr.mxu0 %v402
    %530 = vmatpush1.msra.mxu0 %v401
    %531 = vmatprep.subr.mxu0 %v398
    %532 = vmatpush1.msra.mxu0 %v397
    %533 = vmatprep.subr.mxu0 %v394
    %534 = vmatpush1.msra.mxu0 %v393
    %535 = vmatprep.subr.mxu0 %v390
    %536 = vmatpush1.msra.mxu0 %v389
    %537 = vmatprep.subr.mxu0 %v386
    %538 = vmatpush1.msra.mxu0 %v385
    %539 = vmatprep.subr.mxu0 %v382
    %540 = vmatpush1.msra.mxu0 %v381
    %541 = vmatprep.subr.mxu0 %v378
    %542 = vmatpush1.msra.mxu0 %v377
    %543 = vmatprep.subr.mxu0 0.0
    %544 = vmatpush2.msra.mxu0 0.0
    %545 = vmatprep.subr.mxu0 0.0
    %546 = vmatpush2.msra.mxu0 0.0
    %547 = vmatprep.subr.mxu0 0.0
    %548 = vmatpush2.msra.mxu0 0.0
    %549 = vmatprep.subr.mxu0 0.0
    %550 = vmatpush2.msra.mxu0 0.0
    %551 = vmatprep.subr.mxu0 0.0
    %552 = vmatpush2.msra.mxu0 0.0
    %553 = vmatprep.subr.mxu0 0.0
    %554 = vmatpush2.msra.mxu0 0.0
    %555 = vmatprep.subr.mxu0 0.0
    %556 = vmatpush2.msra.mxu0 0.0
    %557 = vmatprep.subr.mxu0 0.0
    %558 = vmatpush2.msra.mxu0 0.0
    %559 = vmatprep.subr.mxu0 0.0
    %560 = vmatpush2.msra.mxu0 0.0
    %561 = vmatprep.subr.mxu0 0.0
    %562 = vmatpush2.msra.mxu0 0.0
    %563 = vmatprep.subr.mxu0 0.0
    %564 = vmatpush2.msra.mxu0 0.0
    %565 = vmatprep.subr.mxu0 0.0
    %566 = vmatpush2.msra.mxu0 0.0
    %567 = vmatprep.subr.mxu0 0.0
    %568 = vmatpush2.msra.mxu0 0.0
    %569 = vmatprep.subr.mxu0 0.0
    %570 = vmatpush2.msra.mxu0 0.0
    %571 = vmatprep.subr.mxu0 0.0
    %572 = vmatpush2.msra.mxu0 0.0
    %573 = vmatprep.subr.mxu0 0.0
    %574 = vmatpush2.msra.mxu0 0.0
    %575 = vmatprep.mubr.f32.mxu0 0.0
    %576 = vmatmul.mubr.f32.gmra.mxu0 0.0
    %v577 = vpop.f32.mrf.mxu0
    %v578 = vadd.f32 0.0, %v577
    %v579 = vpop.f32.mrf.mxu0
    %v580 = vadd.f32 0.0, %v579
    %581 = vdwg.mxu0
    %v586 = vcombine.low %v507, %v509
    %v587 = vcombine.low %v578, %v580
    %v589 = vunpack.c.l.s4 1966171168
    %v590 = vunpack.c.0.s8 %v589
    %v591 = vlaneseq
    %v592 = vshrl.u32 %v591, 7
    %v593 = vsub.s32 %v590, %v592
    %v594 = vrot.slane %v586, %v593
    %v596 = vunpack.c.l.s4 1966171168
    %v597 = vunpack.c.0.s8 %v596
    %v598 = vlaneseq
    %v599 = vshrl.u32 %v598, 7
    %v600 = vsub.s32 %v597, %v599
    %v601 = vrot.slane %v587, %v600
    %v602 = vcombine.low %v594, %v601
    %v604 = vunpack.c.l.s4 1966171168
    %v605 = vunpack.c.0.s8 %v604
    %v606 = vlaneseq
    %v607 = vshrl.u32 %v606, 7
    %v608 = vsub.s32 %v605, %v607
    %v609 = vrot.slane %v602, %v608
    %v611 = vadd.f32 %v439, %v609
    %v612 = vmul.f32 %v611, 0.5
    %v613 = vtanh.pop %v612
    %v614 = vadd.f32 %v613, 1.0
    %v615 = vmul.f32 %v614, 0.5
    %v617 = vrot.slane %v611, 1
    %v619 = vmul.f32 %v617, 0.5
    %v620 = vtanh.pop %v619
    %v621 = vadd.f32 %v620, 1.0
    %v622 = vmul.f32 %v621, 0.5
    %v623 = vrot.slane %v611, 2
    %v625 = vtanh.pop %v623
    %v626 = vrot.slane %v611, 3
    %v628 = vmul.f32 %v626, 0.5
    %v629 = vtanh.pop %v628
    %v630 = vadd.f32 %v629, 1.0
    %v631 = vmul.f32 %v630, 0.5
    %v632 = vmul.f32 %v622, 0.0
    %v633 = vmul.f32 %v615, %v625
    %v634 = vadd.f32 %v632, %v633
    %v635 = vtanh.pop %v634
    %v636 = vmul.f32 %v631, %v635
    %637 = vst [vmem:[#allocation3] sm:$0x1] %v636
    %s638 = scalar_lea.vmem [#allocation2], 1
    %v639 = vld [vmem:[%s638] ss:$8 sm:$0xf]
    %640 = vmatprep.subr.mxu0 %v436
    %641 = vmatpush1.msra.mxu0 %v435
    %642 = vmatprep.subr.mxu0 %v432
    %643 = vmatpush1.msra.mxu0 %v431
    %644 = vmatprep.subr.mxu0 %v428
    %645 = vmatpush1.msra.mxu0 %v427
    %646 = vmatprep.subr.mxu0 %v424
    %647 = vmatpush1.msra.mxu0 %v423
    %648 = vmatprep.subr.mxu0 %v420
    %649 = vmatpush1.msra.mxu0 %v419
    %650 = vmatprep.subr.mxu0 %v416
    %651 = vmatpush1.msra.mxu0 %v415
    %652 = vmatprep.subr.mxu0 %v412
    %653 = vmatpush1.msra.mxu0 %v411
    %654 = vmatprep.subr.mxu0 %v408
    %655 = vmatpush1.msra.mxu0 %v407
    %656 = vmatprep.subr.mxu0 %v404
    %657 = vmatpush1.msra.mxu0 %v403
    %658 = vmatprep.subr.mxu0 %v400
    %659 = vmatpush1.msra.mxu0 %v399
    %660 = vmatprep.subr.mxu0 %v396
    %661 = vmatpush1.msra.mxu0 %v395
    %662 = vmatprep.subr.mxu0 %v392
    %663 = vmatpush1.msra.mxu0 %v391
    %664 = vmatprep.subr.mxu0 %v388
    %665 = vmatpush1.msra.mxu0 %v387
    %666 = vmatprep.subr.mxu0 %v384
    %667 = vmatpush1.msra.mxu0 %v383
    %668 = vmatprep.subr.mxu0 %v380
    %669 = vmatpush1.msra.mxu0 %v379
    %670 = vmatprep.subr.mxu0 %v376
    %671 = vmatpush1.msra.mxu0 %v375
    %672 = vmatprep.subr.mxu0 0.0
    %673 = vmatpush2.msra.mxu0 0.0
    %674 = vmatprep.subr.mxu0 0.0
    %675 = vmatpush2.msra.mxu0 0.0
    %676 = vmatprep.subr.mxu0 0.0
    %677 = vmatpush2.msra.mxu0 0.0
    %678 = vmatprep.subr.mxu0 0.0
    %679 = vmatpush2.msra.mxu0 0.0
    %680 = vmatprep.subr.mxu0 0.0
    %681 = vmatpush2.msra.mxu0 0.0
    %682 = vmatprep.subr.mxu0 0.0
    %683 = vmatpush2.msra.mxu0 0.0
    %684 = vmatprep.subr.mxu0 0.0
    %685 = vmatpush2.msra.mxu0 0.0
    %686 = vmatprep.subr.mxu0 0.0
    %687 = vmatpush2.msra.mxu0 0.0
    %688 = vmatprep.subr.mxu0 0.0
    %689 = vmatpush2.msra.mxu0 0.0
    %690 = vmatprep.subr.mxu0 0.0
    %691 = vmatpush2.msra.mxu0 0.0
    %692 = vmatprep.subr.mxu0 0.0
    %693 = vmatpush2.msra.mxu0 0.0
    %694 = vmatprep.subr.mxu0 0.0
    %695 = vmatpush2.msra.mxu0 0.0
    %696 = vmatprep.subr.mxu0 0.0
    %697 = vmatpush2.msra.mxu0 0.0
    %698 = vmatprep.subr.mxu0 0.0
    %699 = vmatpush2.msra.mxu0 0.0
    %700 = vmatprep.subr.mxu0 0.0
    %701 = vmatpush2.msra.mxu0 0.0
    %702 = vmatprep.subr.mxu0 0.0
    %703 = vmatpush2.msra.mxu0 0.0
    %704 = vmatprep.mubr.f32.mxu0 0.0
    %705 = vmatmul.mubr.f32.gmra.mxu0 %v636
    %v706 = vpop.f32.mrf.mxu0
    %v707 = vadd.f32 0.0, %v706
    %v708 = vpop.f32.mrf.mxu0
    %v709 = vadd.f32 0.0, %v708
    %710 = vdwg.mxu0
    %711 = vmatprep.subr.mxu0 %v438
    %712 = vmatpush1.msra.mxu0 %v437
    %713 = vmatprep.subr.mxu0 %v434
    %714 = vmatpush1.msra.mxu0 %v433
    %715 = vmatprep.subr.mxu0 %v430
    %716 = vmatpush1.msra.mxu0 %v429
    %717 = vmatprep.subr.mxu0 %v426
    %718 = vmatpush1.msra.mxu0 %v425
    %719 = vmatprep.subr.mxu0 %v422
    %720 = vmatpush1.msra.mxu0 %v421
    %721 = vmatprep.subr.mxu0 %v418
    %722 = vmatpush1.msra.mxu0 %v417
    %723 = vmatprep.subr.mxu0 %v414
    %724 = vmatpush1.msra.mxu0 %v413
    %725 = vmatprep.subr.mxu0 %v410
    %726 = vmatpush1.msra.mxu0 %v409
    %727 = vmatprep.subr.mxu0 %v406
    %728 = vmatpush1.msra.mxu0 %v405
    %729 = vmatprep.subr.mxu0 %v402
    %730 = vmatpush1.msra.mxu0 %v401
    %731 = vmatprep.subr.mxu0 %v398
    %732 = vmatpush1.msra.mxu0 %v397
    %733 = vmatprep.subr.mxu0 %v394
    %734 = vmatpush1.msra.mxu0 %v393
    %735 = vmatprep.subr.mxu0 %v390
    %736 = vmatpush1.msra.mxu0 %v389
    %737 = vmatprep.subr.mxu0 %v386
    %738 = vmatpush1.msra.mxu0 %v385
    %739 = vmatprep.subr.mxu0 %v382
    %740 = vmatpush1.msra.mxu0 %v381
    %741 = vmatprep.subr.mxu0 %v378
    %742 = vmatpush1.msra.mxu0 %v377
    %743 = vmatprep.subr.mxu0 0.0
    %744 = vmatpush2.msra.mxu0 0.0
    %745 = vmatprep.subr.mxu0 0.0
    %746 = vmatpush2.msra.mxu0 0.0
    %747 = vmatprep.subr.mxu0 0.0
    %748 = vmatpush2.msra.mxu0 0.0
    %749 = vmatprep.subr.mxu0 0.0
    %750 = vmatpush2.msra.mxu0 0.0
    %751 = vmatprep.subr.mxu0 0.0
    %752 = vmatpush2.msra.mxu0 0.0
    %753 = vmatprep.subr.mxu0 0.0
    %754 = vmatpush2.msra.mxu0 0.0
    %755 = vmatprep.subr.mxu0 0.0
    %756 = vmatpush2.msra.mxu0 0.0
    %757 = vmatprep.subr.mxu0 0.0
    %758 = vmatpush2.msra.mxu0 0.0
    %759 = vmatprep.subr.mxu0 0.0
    %760 = vmatpush2.msra.mxu0 0.0
    %761 = vmatprep.subr.mxu0 0.0
    %762 = vmatpush2.msra.mxu0 0.0
    %763 = vmatprep.subr.mxu0 0.0
    %764 = vmatpush2.msra.mxu0 0.0
    %765 = vmatprep.subr.mxu0 0.0
    %766 = vmatpush2.msra.mxu0 0.0
    %767 = vmatprep.subr.mxu0 0.0
    %768 = vmatpush2.msra.mxu0 0.0
    %769 = vmatprep.subr.mxu0 0.0
    %770 = vmatpush2.msra.mxu0 0.0
    %771 = vmatprep.subr.mxu0 0.0
    %772 = vmatpush2.msra.mxu0 0.0
    %773 = vmatprep.subr.mxu0 0.0
    %774 = vmatpush2.msra.mxu0 0.0
    %775 = vmatprep.mubr.f32.mxu0 0.0
    %776 = vmatmul.mubr.f32.gmra.mxu0 %v636
    %v777 = vpop.f32.mrf.mxu0
    %v778 = vadd.f32 0.0, %v777
    %v779 = vpop.f32.mrf.mxu0
    %v780 = vadd.f32 0.0, %v779
    %781 = vdwg.mxu0
    %v786 = vcombine.low %v707, %v709
    %v787 = vcombine.low %v778, %v780
    %v789 = vunpack.c.l.s4 1966171168
    %v790 = vunpack.c.0.s8 %v789
    %v791 = vlaneseq
    %v792 = vshrl.u32 %v791, 7
    %v793 = vsub.s32 %v790, %v792
    %v794 = vrot.slane %v786, %v793
    %v796 = vunpack.c.l.s4 1966171168
    %v797 = vunpack.c.0.s8 %v796
    %v798 = vlaneseq
    %v799 = vshrl.u32 %v798, 7
    %v800 = vsub.s32 %v797, %v799
    %v801 = vrot.slane %v787, %v800
    %v802 = vcombine.low %v794, %v801
    %v804 = vunpack.c.l.s4 1966171168
    %v805 = vunpack.c.0.s8 %v804
    %v806 = vlaneseq
    %v807 = vshrl.u32 %v806, 7
    %v808 = vsub.s32 %v805, %v807
    %v809 = vrot.slane %v802, %v808
    %v811 = vadd.f32 %v639, %v809
    %v812 = vmul.f32 %v811, 0.5
    %v813 = vtanh.pop %v812
    %v814 = vadd.f32 %v813, 1.0
    %v815 = vmul.f32 %v814, 0.5
    %v817 = vrot.slane %v811, 1
    %v819 = vmul.f32 %v817, 0.5
    %v820 = vtanh.pop %v819
    %v821 = vadd.f32 %v820, 1.0
    %v822 = vmul.f32 %v821, 0.5
    %v823 = vrot.slane %v811, 2
    %v825 = vtanh.pop %v823
    %v826 = vrot.slane %v811, 3
    %v828 = vmul.f32 %v826, 0.5
    %v829 = vtanh.pop %v828
    %v830 = vadd.f32 %v829, 1.0
    %v831 = vmul.f32 %v830, 0.5
    %v832 = vmul.f32 %v822, %v634
    %v833 = vmul.f32 %v815, %v825
    %v834 = vadd.f32 %v832, %v833
    %v835 = vtanh.pop %v834
    %v836 = vmul.f32 %v831, %v835
    %837 = vst [vmem:[#allocation3 + $0x1] sm:$0x1] %v836
    %s838 = scalar_lea.vmem [#allocation2], 2
    %v839 = vld [vmem:[%s838] ss:$8 sm:$0xf]
    %840 = vmatprep.subr.mxu0 %v436
    %841 = vmatpush1.msra.mxu0 %v435
    %842 = vmatprep.subr.mxu0 %v432
    %843 = vmatpush1.msra.mxu0 %v431
    %844 = vmatprep.subr.mxu0 %v428
    %845 = vmatpush1.msra.mxu0 %v427
    %846 = vmatprep.subr.mxu0 %v424
    %847 = vmatpush1.msra.mxu0 %v423
    %848 = vmatprep.subr.mxu0 %v420
    %849 = vmatpush1.msra.mxu0 %v419
    %850 = vmatprep.subr.mxu0 %v416
    %851 = vmatpush1.msra.mxu0 %v415
    %852 = vmatprep.subr.mxu0 %v412
    %853 = vmatpush1.msra.mxu0 %v411
    %854 = vmatprep.subr.mxu0 %v408
    %855 = vmatpush1.msra.mxu0 %v407
    %856 = vmatprep.subr.mxu0 %v404
    %857 = vmatpush1.msra.mxu0 %v403
    %858 = vmatprep.subr.mxu0 %v400
    %859 = vmatpush1.msra.mxu0 %v399
    %860 = vmatprep.subr.mxu0 %v396
    %861 = vmatpush1.msra.mxu0 %v395
    %862 = vmatprep.subr.mxu0 %v392
    %863 = vmatpush1.msra.mxu0 %v391
    %864 = vmatprep.subr.mxu0 %v388
    %865 = vmatpush1.msra.mxu0 %v387
    %866 = vmatprep.subr.mxu0 %v384
    %867 = vmatpush1.msra.mxu0 %v383
    %868 = vmatprep.subr.mxu0 %v380
    %869 = vmatpush1.msra.mxu0 %v379
    %870 = vmatprep.subr.mxu0 %v376
    %871 = vmatpush1.msra.mxu0 %v375
    %872 = vmatprep.subr.mxu0 0.0
    %873 = vmatpush2.msra.mxu0 0.0
    %874 = vmatprep.subr.mxu0 0.0
    %875 = vmatpush2.msra.mxu0 0.0
    %876 = vmatprep.subr.mxu0 0.0
    %877 = vmatpush2.msra.mxu0 0.0
    %878 = vmatprep.subr.mxu0 0.0
    %879 = vmatpush2.msra.mxu0 0.0
    %880 = vmatprep.subr.mxu0 0.0
    %881 = vmatpush2.msra.mxu0 0.0
    %882 = vmatprep.subr.mxu0 0.0
    %883 = vmatpush2.msra.mxu0 0.0
    %884 = vmatprep.subr.mxu0 0.0
    %885 = vmatpush2.msra.mxu0 0.0
    %886 = vmatprep.subr.mxu0 0.0
    %887 = vmatpush2.msra.mxu0 0.0
    %888 = vmatprep.subr.mxu0 0.0
    %889 = vmatpush2.msra.mxu0 0.0
    %890 = vmatprep.subr.mxu0 0.0
    %891 = vmatpush2.msra.mxu0 0.0
    %892 = vmatprep.subr.mxu0 0.0
    %893 = vmatpush2.msra.mxu0 0.0
    %894 = vmatprep.subr.mxu0 0.0
    %895 = vmatpush2.msra.mxu0 0.0
    %896 = vmatprep.subr.mxu0 0.0
    %897 = vmatpush2.msra.mxu0 0.0
    %898 = vmatprep.subr.mxu0 0.0
    %899 = vmatpush2.msra.mxu0 0.0
    %900 = vmatprep.subr.mxu0 0.0
    %901 = vmatpush2.msra.mxu0 0.0
    %902 = vmatprep.subr.mxu0 0.0
    %903 = vmatpush2.msra.mxu0 0.0
    %904 = vmatprep.mubr.f32.mxu0 0.0
    %905 = vmatmul.mubr.f32.gmra.mxu0 %v836
    %v906 = vpop.f32.mrf.mxu0
    %v907 = vadd.f32 0.0, %v906
    %v908 = vpop.f32.mrf.mxu0
    %v909 = vadd.f32 0.0, %v908
    %910 = vdwg.mxu0
    %911 = vmatprep.subr.mxu0 %v438
    %912 = vmatpush1.msra.mxu0 %v437
    %913 = vmatprep.subr.mxu0 %v434
    %914 = vmatpush1.msra.mxu0 %v433
    %915 = vmatprep.subr.mxu0 %v430
    %916 = vmatpush1.msra.mxu0 %v429
    %917 = vmatprep.subr.mxu0 %v426
    %918 = vmatpush1.msra.mxu0 %v425
    %919 = vmatprep.subr.mxu0 %v422
    %920 = vmatpush1.msra.mxu0 %v421
    %921 = vmatprep.subr.mxu0 %v418
    %922 = vmatpush1.msra.mxu0 %v417
    %923 = vmatprep.subr.mxu0 %v414
    %924 = vmatpush1.msra.mxu0 %v413
    %925 = vmatprep.subr.mxu0 %v410
    %926 = vmatpush1.msra.mxu0 %v409
    %927 = vmatprep.subr.mxu0 %v406
    %928 = vmatpush1.msra.mxu0 %v405
    %929 = vmatprep.subr.mxu0 %v402
    %930 = vmatpush1.msra.mxu0 %v401
    %931 = vmatprep.subr.mxu0 %v398
    %932 = vmatpush1.msra.mxu0 %v397
    %933 = vmatprep.subr.mxu0 %v394
    %934 = vmatpush1.msra.mxu0 %v393
    %935 = vmatprep.subr.mxu0 %v390
    %936 = vmatpush1.msra.mxu0 %v389
    %937 = vmatprep.subr.mxu0 %v386
    %938 = vmatpush1.msra.mxu0 %v385
    %939 = vmatprep.subr.mxu0 %v382
    %940 = vmatpush1.msra.mxu0 %v381
    %941 = vmatprep.subr.mxu0 %v378
    %942 = vmatpush1.msra.mxu0 %v377
    %943 = vmatprep.subr.mxu0 0.0
    %944 = vmatpush2.msra.mxu0 0.0
    %945 = vmatprep.subr.mxu0 0.0
    %946 = vmatpush2.msra.mxu0 0.0
    %947 = vmatprep.subr.mxu0 0.0
    %948 = vmatpush2.msra.mxu0 0.0
    %949 = vmatprep.subr.mxu0 0.0
    %950 = vmatpush2.msra.mxu0 0.0
    %951 = vmatprep.subr.mxu0 0.0
    %952 = vmatpush2.msra.mxu0 0.0
    %953 = vmatprep.subr.mxu0 0.0
    %954 = vmatpush2.msra.mxu0 0.0
    %955 = vmatprep.subr.mxu0 0.0
    %956 = vmatpush2.msra.mxu0 0.0
    %957 = vmatprep.subr.mxu0 0.0
    %958 = vmatpush2.msra.mxu0 0.0
    %959 = vmatprep.subr.mxu0 0.0
    %960 = vmatpush2.msra.mxu0 0.0
    %961 = vmatprep.subr.mxu0 0.0
    %962 = vmatpush2.msra.mxu0 0.0
    %963 = vmatprep.subr.mxu0 0.0
    %964 = vmatpush2.msra.mxu0 0.0
    %965 = vmatprep.subr.mxu0 0.0
    %966 = vmatpush2.msra.mxu0 0.0
    %967 = vmatprep.subr.mxu0 0.0
    %968 = vmatpush2.msra.mxu0 0.0
    %969 = vmatprep.subr.mxu0 0.0
    %970 = vmatpush2.msra.mxu0 0.0
    %971 = vmatprep.subr.mxu0 0.0
    %972 = vmatpush2.msra.mxu0 0.0
    %973 = vmatprep.subr.mxu0 0.0
    %974 = vmatpush2.msra.mxu0 0.0
    %975 = vmatprep.mubr.f32.mxu0 0.0
    %976 = vmatmul.mubr.f32.gmra.mxu0 %v836
    %v977 = vpop.f32.mrf.mxu0
    %v978 = vadd.f32 0.0, %v977
    %v979 = vpop.f32.mrf.mxu0
    %v980 = vadd.f32 0.0, %v979
    %981 = vdwg.mxu0
    %v986 = vcombine.low %v907, %v909
    %v987 = vcombine.low %v978, %v980
    %v989 = vunpack.c.l.s4 1966171168
    %v990 = vunpack.c.0.s8 %v989
    %v991 = vlaneseq
    %v992 = vshrl.u32 %v991, 7
    %v993 = vsub.s32 %v990, %v992
    %v994 = vrot.slane %v986, %v993
    %v996 = vunpack.c.l.s4 1966171168
    %v997 = vunpack.c.0.s8 %v996
    %v998 = vlaneseq
    %v999 = vshrl.u32 %v998, 7
    %v1000 = vsub.s32 %v997, %v999
    %v1001 = vrot.slane %v987, %v1000
    %v1002 = vcombine.low %v994, %v1001
    %v1004 = vunpack.c.l.s4 1966171168
    %v1005 = vunpack.c.0.s8 %v1004
    %v1006 = vlaneseq
    %v1007 = vshrl.u32 %v1006, 7
    %v1008 = vsub.s32 %v1005, %v1007
    %v1009 = vrot.slane %v1002, %v1008
    %v1011 = vadd.f32 %v839, %v1009
    %v1012 = vmul.f32 %v1011, 0.5
    %v1013 = vtanh.pop %v1012
    %v1014 = vadd.f32 %v1013, 1.0
    %v1015 = vmul.f32 %v1014, 0.5
    %v1017 = vrot.slane %v1011, 1
    %v1019 = vmul.f32 %v1017, 0.5
    %v1020 = vtanh.pop %v1019
    %v1021 = vadd.f32 %v1020, 1.0
    %v1022 = vmul.f32 %v1021, 0.5
    %v1023 = vrot.slane %v1011, 2
    %v1025 = vtanh.pop %v1023
    %v1026 = vrot.slane %v1011, 3
    %v1028 = vmul.f32 %v1026, 0.5
    %v1029 = vtanh.pop %v1028
    %v1030 = vadd.f32 %v1029, 1.0
    %v1031 = vmul.f32 %v1030, 0.5
    %v1032 = vmul.f32 %v1022, %v834
    %v1033 = vmul.f32 %v1015, %v1025
    %v1034 = vadd.f32 %v1032, %v1033
    %v1035 = vtanh.pop %v1034
    %v1036 = vmul.f32 %v1031, %v1035
    %1037 = vst [vmem:[#allocation3 + $0x2] sm:$0x1] %v1036
    %s1038 = scalar_lea.vmem [#allocation2], 3
    %v1039 = vld [vmem:[%s1038] ss:$8 sm:$0xf]
    %1040 = vmatprep.subr.mxu0 %v436
    %1041 = vmatpush1.msra.mxu0 %v435
    %1042 = vmatprep.subr.mxu0 %v432
    %1043 = vmatpush1.msra.mxu0 %v431
    %1044 = vmatprep.subr.mxu0 %v428
    %1045 = vmatpush1.msra.mxu0 %v427
    %1046 = vmatprep.subr.mxu0 %v424
    %1047 = vmatpush1.msra.mxu0 %v423
    %1048 = vmatprep.subr.mxu0 %v420
    %1049 = vmatpush1.msra.mxu0 %v419
    %1050 = vmatprep.subr.mxu0 %v416
    %1051 = vmatpush1.msra.mxu0 %v415
    %1052 = vmatprep.subr.mxu0 %v412
    %1053 = vmatpush1.msra.mxu0 %v411
    %1054 = vmatprep.subr.mxu0 %v408
    %1055 = vmatpush1.msra.mxu0 %v407
    %1056 = vmatprep.subr.mxu0 %v404
    %1057 = vmatpush1.msra.mxu0 %v403
    %1058 = vmatprep.subr.mxu0 %v400
    %1059 = vmatpush1.msra.mxu0 %v399
    %1060 = vmatprep.subr.mxu0 %v396
    %1061 = vmatpush1.msra.mxu0 %v395
    %1062 = vmatprep.subr.mxu0 %v392
    %1063 = vmatpush1.msra.mxu0 %v391
    %1064 = vmatprep.subr.mxu0 %v388
    %1065 = vmatpush1.msra.mxu0 %v387
    %1066 = vmatprep.subr.mxu0 %v384
    %1067 = vmatpush1.msra.mxu0 %v383
    %1068 = vmatprep.subr.mxu0 %v380
    %1069 = vmatpush1.msra.mxu0 %v379
    %1070 = vmatprep.subr.mxu0 %v376
    %1071 = vmatpush1.msra.mxu0 %v375
    %1072 = vmatprep.subr.mxu0 0.0
    %1073 = vmatpush2.msra.mxu0 0.0
    %1074 = vmatprep.subr.mxu0 0.0
    %1075 = vmatpush2.msra.mxu0 0.0
    %1076 = vmatprep.subr.mxu0 0.0
    %1077 = vmatpush2.msra.mxu0 0.0
    %1078 = vmatprep.subr.mxu0 0.0
    %1079 = vmatpush2.msra.mxu0 0.0
    %1080 = vmatprep.subr.mxu0 0.0
    %1081 = vmatpush2.msra.mxu0 0.0
    %1082 = vmatprep.subr.mxu0 0.0
    %1083 = vmatpush2.msra.mxu0 0.0
    %1084 = vmatprep.subr.mxu0 0.0
    %1085 = vmatpush2.msra.mxu0 0.0
    %1086 = vmatprep.subr.mxu0 0.0
    %1087 = vmatpush2.msra.mxu0 0.0
    %1088 = vmatprep.subr.mxu0 0.0
    %1089 = vmatpush2.msra.mxu0 0.0
    %1090 = vmatprep.subr.mxu0 0.0
    %1091 = vmatpush2.msra.mxu0 0.0
    %1092 = vmatprep.subr.mxu0 0.0
    %1093 = vmatpush2.msra.mxu0 0.0
    %1094 = vmatprep.subr.mxu0 0.0
    %1095 = vmatpush2.msra.mxu0 0.0
    %1096 = vmatprep.subr.mxu0 0.0
    %1097 = vmatpush2.msra.mxu0 0.0
    %1098 = vmatprep.subr.mxu0 0.0
    %1099 = vmatpush2.msra.mxu0 0.0
    %1100 = vmatprep.subr.mxu0 0.0
    %1101 = vmatpush2.msra.mxu0 0.0
    %1102 = vmatprep.subr.mxu0 0.0
    %1103 = vmatpush2.msra.mxu0 0.0
    %1104 = vmatprep.mubr.f32.mxu0 0.0
    %1105 = vmatmul.mubr.f32.gmra.mxu0 %v1036
    %v1106 = vpop.f32.mrf.mxu0
    %v1107 = vadd.f32 0.0, %v1106
    %v1108 = vpop.f32.mrf.mxu0
    %v1109 = vadd.f32 0.0, %v1108
    %1110 = vdwg.mxu0
    %1111 = vmatprep.subr.mxu0 %v438
    %1112 = vmatpush1.msra.mxu0 %v437
    %1113 = vmatprep.subr.mxu0 %v434
    %1114 = vmatpush1.msra.mxu0 %v433
    %1115 = vmatprep.subr.mxu0 %v430
    %1116 = vmatpush1.msra.mxu0 %v429
    %1117 = vmatprep.subr.mxu0 %v426
    %1118 = vmatpush1.msra.mxu0 %v425
    %1119 = vmatprep.subr.mxu0 %v422
    %1120 = vmatpush1.msra.mxu0 %v421
    %1121 = vmatprep.subr.mxu0 %v418
    %1122 = vmatpush1.msra.mxu0 %v417
    %1123 = vmatprep.subr.mxu0 %v414
    %1124 = vmatpush1.msra.mxu0 %v413
    %1125 = vmatprep.subr.mxu0 %v410
    %1126 = vmatpush1.msra.mxu0 %v409
    %1127 = vmatprep.subr.mxu0 %v406
    %1128 = vmatpush1.msra.mxu0 %v405
    %1129 = vmatprep.subr.mxu0 %v402
    %1130 = vmatpush1.msra.mxu0 %v401
    %1131 = vmatprep.subr.mxu0 %v398
    %1132 = vmatpush1.msra.mxu0 %v397
    %1133 = vmatprep.subr.mxu0 %v394
    %1134 = vmatpush1.msra.mxu0 %v393
    %1135 = vmatprep.subr.mxu0 %v390
    %1136 = vmatpush1.msra.mxu0 %v389
    %1137 = vmatprep.subr.mxu0 %v386
    %1138 = vmatpush1.msra.mxu0 %v385
    %1139 = vmatprep.subr.mxu0 %v382
    %1140 = vmatpush1.msra.mxu0 %v381
    %1141 = vmatprep.subr.mxu0 %v378
    %1142 = vmatpush1.msra.mxu0 %v377
    %1143 = vmatprep.subr.mxu0 0.0
    %1144 = vmatpush2.msra.mxu0 0.0
    %1145 = vmatprep.subr.mxu0 0.0
    %1146 = vmatpush2.msra.mxu0 0.0
    %1147 = vmatprep.subr.mxu0 0.0
    %1148 = vmatpush2.msra.mxu0 0.0
    %1149 = vmatprep.subr.mxu0 0.0
    %1150 = vmatpush2.msra.mxu0 0.0
    %1151 = vmatprep.subr.mxu0 0.0
    %1152 = vmatpush2.msra.mxu0 0.0
    %1153 = vmatprep.subr.mxu0 0.0
    %1154 = vmatpush2.msra.mxu0 0.0
    %1155 = vmatprep.subr.mxu0 0.0
    %1156 = vmatpush2.msra.mxu0 0.0
    %1157 = vmatprep.subr.mxu0 0.0
    %1158 = vmatpush2.msra.mxu0 0.0
    %1159 = vmatprep.subr.mxu0 0.0
    %1160 = vmatpush2.msra.mxu0 0.0
    %1161 = vmatprep.subr.mxu0 0.0
    %1162 = vmatpush2.msra.mxu0 0.0
    %1163 = vmatprep.subr.mxu0 0.0
    %1164 = vmatpush2.msra.mxu0 0.0
    %1165 = vmatprep.subr.mxu0 0.0
    %1166 = vmatpush2.msra.mxu0 0.0
    %1167 = vmatprep.subr.mxu0 0.0
    %1168 = vmatpush2.msra.mxu0 0.0
    %1169 = vmatprep.subr.mxu0 0.0
    %1170 = vmatpush2.msra.mxu0 0.0
    %1171 = vmatprep.subr.mxu0 0.0
    %1172 = vmatpush2.msra.mxu0 0.0
    %1173 = vmatprep.subr.mxu0 0.0
    %1174 = vmatpush2.msra.mxu0 0.0
    %1175 = vmatprep.mubr.f32.mxu0 0.0
    %1176 = vmatmul.mubr.f32.gmra.mxu0 %v1036
    %v1177 = vpop.f32.mrf.mxu0
    %v1178 = vadd.f32 0.0, %v1177
    %v1179 = vpop.f32.mrf.mxu0
    %v1180 = vadd.f32 0.0, %v1179
    %1181 = vdwg.mxu0
    %v1186 = vcombine.low %v1107, %v1109
    %v1187 = vcombine.low %v1178, %v1180
    %v1189 = vunpack.c.l.s4 1966171168
    %v1190 = vunpack.c.0.s8 %v1189
    %v1191 = vlaneseq
    %v1192 = vshrl.u32 %v1191, 7
    %v1193 = vsub.s32 %v1190, %v1192
    %v1194 = vrot.slane %v1186, %v1193
    %v1196 = vunpack.c.l.s4 1966171168
    %v1197 = vunpack.c.0.s8 %v1196
    %v1198 = vlaneseq
    %v1199 = vshrl.u32 %v1198, 7
    %v1200 = vsub.s32 %v1197, %v1199
    %v1201 = vrot.slane %v1187, %v1200
    %v1202 = vcombine.low %v1194, %v1201
    %v1204 = vunpack.c.l.s4 1966171168
    %v1205 = vunpack.c.0.s8 %v1204
    %v1206 = vlaneseq
    %v1207 = vshrl.u32 %v1206, 7
    %v1208 = vsub.s32 %v1205, %v1207
    %v1209 = vrot.slane %v1202, %v1208
    %v1211 = vadd.f32 %v1039, %v1209
    %v1212 = vmul.f32 %v1211, 0.5
    %v1213 = vtanh.pop %v1212
    %v1214 = vadd.f32 %v1213, 1.0
    %v1215 = vmul.f32 %v1214, 0.5
    %v1217 = vrot.slane %v1211, 1
    %v1219 = vmul.f32 %v1217, 0.5
    %v1220 = vtanh.pop %v1219
    %v1221 = vadd.f32 %v1220, 1.0
    %v1222 = vmul.f32 %v1221, 0.5
    %v1223 = vrot.slane %v1211, 2
    %v1225 = vtanh.pop %v1223
    %v1226 = vrot.slane %v1211, 3
    %v1228 = vmul.f32 %v1226, 0.5
    %v1229 = vtanh.pop %v1228
    %v1230 = vadd.f32 %v1229, 1.0
    %v1231 = vmul.f32 %v1230, 0.5
    %v1232 = vmul.f32 %v1222, %v1034
    %v1233 = vmul.f32 %v1215, %v1225
    %v1234 = vadd.f32 %v1232, %v1233
    %v1235 = vtanh.pop %v1234
    %v1236 = vmul.f32 %v1231, %v1235
    %1237 = vst [vmem:[#allocation3 + $0x3] sm:$0x1] %v1236
    %s1238 = scalar_lea.vmem [#allocation2], 4
    %v1239 = vld [vmem:[%s1238] ss:$8 sm:$0xf]
    %1240 = vmatprep.subr.mxu0 %v436
    %1241 = vmatpush1.msra.mxu0 %v435
    %1242 = vmatprep.subr.mxu0 %v432
    %1243 = vmatpush1.msra.mxu0 %v431
    %1244 = vmatprep.subr.mxu0 %v428
    %1245 = vmatpush1.msra.mxu0 %v427
    %1246 = vmatprep.subr.mxu0 %v424
    %1247 = vmatpush1.msra.mxu0 %v423
    %1248 = vmatprep.subr.mxu0 %v420
    %1249 = vmatpush1.msra.mxu0 %v419
    %1250 = vmatprep.subr.mxu0 %v416
    %1251 = vmatpush1.msra.mxu0 %v415
    %1252 = vmatprep.subr.mxu0 %v412
    %1253 = vmatpush1.msra.mxu0 %v411
    %1254 = vmatprep.subr.mxu0 %v408
    %1255 = vmatpush1.msra.mxu0 %v407
    %1256 = vmatprep.subr.mxu0 %v404
    %1257 = vmatpush1.msra.mxu0 %v403
    %1258 = vmatprep.subr.mxu0 %v400
    %1259 = vmatpush1.msra.mxu0 %v399
    %1260 = vmatprep.subr.mxu0 %v396
    %1261 = vmatpush1.msra.mxu0 %v395
    %1262 = vmatprep.subr.mxu0 %v392
    %1263 = vmatpush1.msra.mxu0 %v391
    %1264 = vmatprep.subr.mxu0 %v388
    %1265 = vmatpush1.msra.mxu0 %v387
    %1266 = vmatprep.subr.mxu0 %v384
    %1267 = vmatpush1.msra.mxu0 %v383
    %1268 = vmatprep.subr.mxu0 %v380
    %1269 = vmatpush1.msra.mxu0 %v379
    %1270 = vmatprep.subr.mxu0 %v376
    %1271 = vmatpush1.msra.mxu0 %v375
    %1272 = vmatprep.subr.mxu0 0.0
    %1273 = vmatpush2.msra.mxu0 0.0
    %1274 = vmatprep.subr.mxu0 0.0
    %1275 = vmatpush2.msra.mxu0 0.0
    %1276 = vmatprep.subr.mxu0 0.0
    %1277 = vmatpush2.msra.mxu0 0.0
    %1278 = vmatprep.subr.mxu0 0.0
    %1279 = vmatpush2.msra.mxu0 0.0
    %1280 = vmatprep.subr.mxu0 0.0
    %1281 = vmatpush2.msra.mxu0 0.0
    %1282 = vmatprep.subr.mxu0 0.0
    %1283 = vmatpush2.msra.mxu0 0.0
    %1284 = vmatprep.subr.mxu0 0.0
    %1285 = vmatpush2.msra.mxu0 0.0
    %1286 = vmatprep.subr.mxu0 0.0
    %1287 = vmatpush2.msra.mxu0 0.0
    %1288 = vmatprep.subr.mxu0 0.0
    %1289 = vmatpush2.msra.mxu0 0.0
    %1290 = vmatprep.subr.mxu0 0.0
    %1291 = vmatpush2.msra.mxu0 0.0
    %1292 = vmatprep.subr.mxu0 0.0
    %1293 = vmatpush2.msra.mxu0 0.0
    %1294 = vmatprep.subr.mxu0 0.0
    %1295 = vmatpush2.msra.mxu0 0.0
    %1296 = vmatprep.subr.mxu0 0.0
    %1297 = vmatpush2.msra.mxu0 0.0
    %1298 = vmatprep.subr.mxu0 0.0
    %1299 = vmatpush2.msra.mxu0 0.0
    %1300 = vmatprep.subr.mxu0 0.0
    %1301 = vmatpush2.msra.mxu0 0.0
    %1302 = vmatprep.subr.mxu0 0.0
    %1303 = vmatpush2.msra.mxu0 0.0
    %1304 = vmatprep.mubr.f32.mxu0 0.0
    %1305 = vmatmul.mubr.f32.gmra.mxu0 %v1236
    %v1306 = vpop.f32.mrf.mxu0
    %v1307 = vadd.f32 0.0, %v1306
    %v1308 = vpop.f32.mrf.mxu0
    %v1309 = vadd.f32 0.0, %v1308
    %1310 = vdwg.mxu0
    %1311 = vmatprep.subr.mxu0 %v438
    %1312 = vmatpush1.msra.mxu0 %v437
    %1313 = vmatprep.subr.mxu0 %v434
    %1314 = vmatpush1.msra.mxu0 %v433
    %1315 = vmatprep.subr.mxu0 %v430
    %1316 = vmatpush1.msra.mxu0 %v429
    %1317 = vmatprep.subr.mxu0 %v426
    %1318 = vmatpush1.msra.mxu0 %v425
    %1319 = vmatprep.subr.mxu0 %v422
    %1320 = vmatpush1.msra.mxu0 %v421
    %1321 = vmatprep.subr.mxu0 %v418
    %1322 = vmatpush1.msra.mxu0 %v417
    %1323 = vmatprep.subr.mxu0 %v414
    %1324 = vmatpush1.msra.mxu0 %v413
    %1325 = vmatprep.subr.mxu0 %v410
    %1326 = vmatpush1.msra.mxu0 %v409
    %1327 = vmatprep.subr.mxu0 %v406
    %1328 = vmatpush1.msra.mxu0 %v405
    %1329 = vmatprep.subr.mxu0 %v402
    %1330 = vmatpush1.msra.mxu0 %v401
    %1331 = vmatprep.subr.mxu0 %v398
    %1332 = vmatpush1.msra.mxu0 %v397
    %1333 = vmatprep.subr.mxu0 %v394
    %1334 = vmatpush1.msra.mxu0 %v393
    %1335 = vmatprep.subr.mxu0 %v390
    %1336 = vmatpush1.msra.mxu0 %v389
    %1337 = vmatprep.subr.mxu0 %v386
    %1338 = vmatpush1.msra.mxu0 %v385
    %1339 = vmatprep.subr.mxu0 %v382
    %1340 = vmatpush1.msra.mxu0 %v381
    %1341 = vmatprep.subr.mxu0 %v378
    %1342 = vmatpush1.msra.mxu0 %v377
    %1343 = vmatprep.subr.mxu0 0.0
    %1344 = vmatpush2.msra.mxu0 0.0
    %1345 = vmatprep.subr.mxu0 0.0
    %1346 = vmatpush2.msra.mxu0 0.0
    %1347 = vmatprep.subr.mxu0 0.0
    %1348 = vmatpush2.msra.mxu0 0.0
    %1349 = vmatprep.subr.mxu0 0.0
    %1350 = vmatpush2.msra.mxu0 0.0
    %1351 = vmatprep.subr.mxu0 0.0
    %1352 = vmatpush2.msra.mxu0 0.0
    %1353 = vmatprep.subr.mxu0 0.0
    %1354 = vmatpush2.msra.mxu0 0.0
    %1355 = vmatprep.subr.mxu0 0.0
    %1356 = vmatpush2.msra.mxu0 0.0
    %1357 = vmatprep.subr.mxu0 0.0
    %1358 = vmatpush2.msra.mxu0 0.0
    %1359 = vmatprep.subr.mxu0 0.0
    %1360 = vmatpush2.msra.mxu0 0.0
    %1361 = vmatprep.subr.mxu0 0.0
    %1362 = vmatpush2.msra.mxu0 0.0
    %1363 = vmatprep.subr.mxu0 0.0
    %1364 = vmatpush2.msra.mxu0 0.0
    %1365 = vmatprep.subr.mxu0 0.0
    %1366 = vmatpush2.msra.mxu0 0.0
    %1367 = vmatprep.subr.mxu0 0.0
    %1368 = vmatpush2.msra.mxu0 0.0
    %1369 = vmatprep.subr.mxu0 0.0
    %1370 = vmatpush2.msra.mxu0 0.0
    %1371 = vmatprep.subr.mxu0 0.0
    %1372 = vmatpush2.msra.mxu0 0.0
    %1373 = vmatprep.subr.mxu0 0.0
    %1374 = vmatpush2.msra.mxu0 0.0
    %1375 = vmatprep.mubr.f32.mxu0 0.0
    %1376 = vmatmul.mubr.f32.gmra.mxu0 %v1236
    %v1377 = vpop.f32.mrf.mxu0
    %v1378 = vadd.f32 0.0, %v1377
    %v1379 = vpop.f32.mrf.mxu0
    %v1380 = vadd.f32 0.0, %v1379
    %1381 = vdwg.mxu0
    %v1386 = vcombine.low %v1307, %v1309
    %v1387 = vcombine.low %v1378, %v1380
    %v1389 = vunpack.c.l.s4 1966171168
    %v1390 = vunpack.c.0.s8 %v1389
    %v1391 = vlaneseq
    %v1392 = vshrl.u32 %v1391, 7
    %v1393 = vsub.s32 %v1390, %v1392
    %v1394 = vrot.slane %v1386, %v1393
    %v1396 = vunpack.c.l.s4 1966171168
    %v1397 = vunpack.c.0.s8 %v1396
    %v1398 = vlaneseq
    %v1399 = vshrl.u32 %v1398, 7
    %v1400 = vsub.s32 %v1397, %v1399
    %v1401 = vrot.slane %v1387, %v1400
    %v1402 = vcombine.low %v1394, %v1401
    %v1404 = vunpack.c.l.s4 1966171168
    %v1405 = vunpack.c.0.s8 %v1404
    %v1406 = vlaneseq
    %v1407 = vshrl.u32 %v1406, 7
    %v1408 = vsub.s32 %v1405, %v1407
    %v1409 = vrot.slane %v1402, %v1408
    %v1411 = vadd.f32 %v1239, %v1409
    %v1412 = vmul.f32 %v1411, 0.5
    %v1413 = vtanh.pop %v1412
    %v1414 = vadd.f32 %v1413, 1.0
    %v1415 = vmul.f32 %v1414, 0.5
    %v1417 = vrot.slane %v1411, 1
    %v1419 = vmul.f32 %v1417, 0.5
    %v1420 = vtanh.pop %v1419
    %v1421 = vadd.f32 %v1420, 1.0
    %v1422 = vmul.f32 %v1421, 0.5
    %v1423 = vrot.slane %v1411, 2
    %v1425 = vtanh.pop %v1423
    %v1426 = vrot.slane %v1411, 3
    %v1428 = vmul.f32 %v1426, 0.5
    %v1429 = vtanh.pop %v1428
    %v1430 = vadd.f32 %v1429, 1.0
    %v1431 = vmul.f32 %v1430, 0.5
    %v1432 = vmul.f32 %v1422, %v1234
    %v1433 = vmul.f32 %v1415, %v1425
    %v1434 = vadd.f32 %v1432, %v1433
    %v1435 = vtanh.pop %v1434
    %v1436 = vmul.f32 %v1431, %v1435
    %1437 = vst [vmem:[#allocation3 + $0x4] sm:$0x1] %v1436
    %s1438 = scalar_lea.vmem [#allocation2], 5
    %v1439 = vld [vmem:[%s1438] ss:$8 sm:$0xf]
    %1440 = vmatprep.subr.mxu0 %v436
    %1441 = vmatpush1.msra.mxu0 %v435
    %1442 = vmatprep.subr.mxu0 %v432
    %1443 = vmatpush1.msra.mxu0 %v431
    %1444 = vmatprep.subr.mxu0 %v428
    %1445 = vmatpush1.msra.mxu0 %v427
    %1446 = vmatprep.subr.mxu0 %v424
    %1447 = vmatpush1.msra.mxu0 %v423
    %1448 = vmatprep.subr.mxu0 %v420
    %1449 = vmatpush1.msra.mxu0 %v419
    %1450 = vmatprep.subr.mxu0 %v416
    %1451 = vmatpush1.msra.mxu0 %v415
    %1452 = vmatprep.subr.mxu0 %v412
    %1453 = vmatpush1.msra.mxu0 %v411
    %1454 = vmatprep.subr.mxu0 %v408
    %1455 = vmatpush1.msra.mxu0 %v407
    %1456 = vmatprep.subr.mxu0 %v404
    %1457 = vmatpush1.msra.mxu0 %v403
    %1458 = vmatprep.subr.mxu0 %v400
    %1459 = vmatpush1.msra.mxu0 %v399
    %1460 = vmatprep.subr.mxu0 %v396
    %1461 = vmatpush1.msra.mxu0 %v395
    %1462 = vmatprep.subr.mxu0 %v392
    %1463 = vmatpush1.msra.mxu0 %v391
    %1464 = vmatprep.subr.mxu0 %v388
    %1465 = vmatpush1.msra.mxu0 %v387
    %1466 = vmatprep.subr.mxu0 %v384
    %1467 = vmatpush1.msra.mxu0 %v383
    %1468 = vmatprep.subr.mxu0 %v380
    %1469 = vmatpush1.msra.mxu0 %v379
    %1470 = vmatprep.subr.mxu0 %v376
    %1471 = vmatpush1.msra.mxu0 %v375
    %1472 = vmatprep.subr.mxu0 0.0
    %1473 = vmatpush2.msra.mxu0 0.0
    %1474 = vmatprep.subr.mxu0 0.0
    %1475 = vmatpush2.msra.mxu0 0.0
    %1476 = vmatprep.subr.mxu0 0.0
    %1477 = vmatpush2.msra.mxu0 0.0
    %1478 = vmatprep.subr.mxu0 0.0
    %1479 = vmatpush2.msra.mxu0 0.0
    %1480 = vmatprep.subr.mxu0 0.0
    %1481 = vmatpush2.msra.mxu0 0.0
    %1482 = vmatprep.subr.mxu0 0.0
    %1483 = vmatpush2.msra.mxu0 0.0
    %1484 = vmatprep.subr.mxu0 0.0
    %1485 = vmatpush2.msra.mxu0 0.0
    %1486 = vmatprep.subr.mxu0 0.0
    %1487 = vmatpush2.msra.mxu0 0.0
    %1488 = vmatprep.subr.mxu0 0.0
    %1489 = vmatpush2.msra.mxu0 0.0
    %1490 = vmatprep.subr.mxu0 0.0
    %1491 = vmatpush2.msra.mxu0 0.0
    %1492 = vmatprep.subr.mxu0 0.0
    %1493 = vmatpush2.msra.mxu0 0.0
    %1494 = vmatprep.subr.mxu0 0.0
    %1495 = vmatpush2.msra.mxu0 0.0
    %1496 = vmatprep.subr.mxu0 0.0
    %1497 = vmatpush2.msra.mxu0 0.0
    %1498 = vmatprep.subr.mxu0 0.0
    %1499 = vmatpush2.msra.mxu0 0.0
    %1500 = vmatprep.subr.mxu0 0.0
    %1501 = vmatpush2.msra.mxu0 0.0
    %1502 = vmatprep.subr.mxu0 0.0
    %1503 = vmatpush2.msra.mxu0 0.0
    %1504 = vmatprep.mubr.f32.mxu0 0.0
    %1505 = vmatmul.mubr.f32.gmra.mxu0 %v1436
    %v1506 = vpop.f32.mrf.mxu0
    %v1507 = vadd.f32 0.0, %v1506
    %v1508 = vpop.f32.mrf.mxu0
    %v1509 = vadd.f32 0.0, %v1508
    %1510 = vdwg.mxu0
    %1511 = vmatprep.subr.mxu0 %v438
    %1512 = vmatpush1.msra.mxu0 %v437
    %1513 = vmatprep.subr.mxu0 %v434
    %1514 = vmatpush1.msra.mxu0 %v433
    %1515 = vmatprep.subr.mxu0 %v430
    %1516 = vmatpush1.msra.mxu0 %v429
    %1517 = vmatprep.subr.mxu0 %v426
    %1518 = vmatpush1.msra.mxu0 %v425
    %1519 = vmatprep.subr.mxu0 %v422
    %1520 = vmatpush1.msra.mxu0 %v421
    %1521 = vmatprep.subr.mxu0 %v418
    %1522 = vmatpush1.msra.mxu0 %v417
    %1523 = vmatprep.subr.mxu0 %v414
    %1524 = vmatpush1.msra.mxu0 %v413
    %1525 = vmatprep.subr.mxu0 %v410
    %1526 = vmatpush1.msra.mxu0 %v409
    %1527 = vmatprep.subr.mxu0 %v406
    %1528 = vmatpush1.msra.mxu0 %v405
    %1529 = vmatprep.subr.mxu0 %v402
    %1530 = vmatpush1.msra.mxu0 %v401
    %1531 = vmatprep.subr.mxu0 %v398
    %1532 = vmatpush1.msra.mxu0 %v397
    %1533 = vmatprep.subr.mxu0 %v394
    %1534 = vmatpush1.msra.mxu0 %v393
    %1535 = vmatprep.subr.mxu0 %v390
    %1536 = vmatpush1.msra.mxu0 %v389
    %1537 = vmatprep.subr.mxu0 %v386
    %1538 = vmatpush1.msra.mxu0 %v385
    %1539 = vmatprep.subr.mxu0 %v382
    %1540 = vmatpush1.msra.mxu0 %v381
    %1541 = vmatprep.subr.mxu0 %v378
    %1542 = vmatpush1.msra.mxu0 %v377
    %1543 = vmatprep.subr.mxu0 0.0
    %1544 = vmatpush2.msra.mxu0 0.0
    %1545 = vmatprep.subr.mxu0 0.0
    %1546 = vmatpush2.msra.mxu0 0.0
    %1547 = vmatprep.subr.mxu0 0.0
    %1548 = vmatpush2.msra.mxu0 0.0
    %1549 = vmatprep.subr.mxu0 0.0
    %1550 = vmatpush2.msra.mxu0 0.0
    %1551 = vmatprep.subr.mxu0 0.0
    %1552 = vmatpush2.msra.mxu0 0.0
    %1553 = vmatprep.subr.mxu0 0.0
    %1554 = vmatpush2.msra.mxu0 0.0
    %1555 = vmatprep.subr.mxu0 0.0
    %1556 = vmatpush2.msra.mxu0 0.0
    %1557 = vmatprep.subr.mxu0 0.0
    %1558 = vmatpush2.msra.mxu0 0.0
    %1559 = vmatprep.subr.mxu0 0.0
    %1560 = vmatpush2.msra.mxu0 0.0
    %1561 = vmatprep.subr.mxu0 0.0
    %1562 = vmatpush2.msra.mxu0 0.0
    %1563 = vmatprep.subr.mxu0 0.0
    %1564 = vmatpush2.msra.mxu0 0.0
    %1565 = vmatprep.subr.mxu0 0.0
    %1566 = vmatpush2.msra.mxu0 0.0
    %1567 = vmatprep.subr.mxu0 0.0
    %1568 = vmatpush2.msra.mxu0 0.0
    %1569 = vmatprep.subr.mxu0 0.0
    %1570 = vmatpush2.msra.mxu0 0.0
    %1571 = vmatprep.subr.mxu0 0.0
    %1572 = vmatpush2.msra.mxu0 0.0
    %1573 = vmatprep.subr.mxu0 0.0
    %1574 = vmatpush2.msra.mxu0 0.0
    %1575 = vmatprep.mubr.f32.mxu0 0.0
    %1576 = vmatmul.mubr.f32.gmra.mxu0 %v1436
    %v1577 = vpop.f32.mrf.mxu0
    %v1578 = vadd.f32 0.0, %v1577
    %v1579 = vpop.f32.mrf.mxu0
    %v1580 = vadd.f32 0.0, %v1579
    %1581 = vdwg.mxu0
    %v1586 = vcombine.low %v1507, %v1509
    %v1587 = vcombine.low %v1578, %v1580
    %v1589 = vunpack.c.l.s4 1966171168
    %v1590 = vunpack.c.0.s8 %v1589
    %v1591 = vlaneseq
    %v1592 = vshrl.u32 %v1591, 7
    %v1593 = vsub.s32 %v1590, %v1592
    %v1594 = vrot.slane %v1586, %v1593
    %v1596 = vunpack.c.l.s4 1966171168
    %v1597 = vunpack.c.0.s8 %v1596
    %v1598 = vlaneseq
    %v1599 = vshrl.u32 %v1598, 7
    %v1600 = vsub.s32 %v1597, %v1599
    %v1601 = vrot.slane %v1587, %v1600
    %v1602 = vcombine.low %v1594, %v1601
    %v1604 = vunpack.c.l.s4 1966171168
    %v1605 = vunpack.c.0.s8 %v1604
    %v1606 = vlaneseq
    %v1607 = vshrl.u32 %v1606, 7
    %v1608 = vsub.s32 %v1605, %v1607
    %v1609 = vrot.slane %v1602, %v1608
    %v1611 = vadd.f32 %v1439, %v1609
    %v1612 = vmul.f32 %v1611, 0.5
    %v1613 = vtanh.pop %v1612
    %v1614 = vadd.f32 %v1613, 1.0
    %v1615 = vmul.f32 %v1614, 0.5
    %v1617 = vrot.slane %v1611, 1
    %v1619 = vmul.f32 %v1617, 0.5
    %v1620 = vtanh.pop %v1619
    %v1621 = vadd.f32 %v1620, 1.0
    %v1622 = vmul.f32 %v1621, 0.5
    %v1623 = vrot.slane %v1611, 2
    %v1625 = vtanh.pop %v1623
    %v1626 = vrot.slane %v1611, 3
    %v1628 = vmul.f32 %v1626, 0.5
    %v1629 = vtanh.pop %v1628
    %v1630 = vadd.f32 %v1629, 1.0
    %v1631 = vmul.f32 %v1630, 0.5
    %v1632 = vmul.f32 %v1622, %v1434
    %v1633 = vmul.f32 %v1615, %v1625
    %v1634 = vadd.f32 %v1632, %v1633
    %v1635 = vtanh.pop %v1634
    %v1636 = vmul.f32 %v1631, %v1635
    %1637 = vst [vmem:[#allocation3 + $0x5] sm:$0x1] %v1636
    %s1638 = scalar_lea.vmem [#allocation2], 6
    %v1639 = vld [vmem:[%s1638] ss:$8 sm:$0xf]
    %1640 = vmatprep.subr.mxu0 %v436
    %1641 = vmatpush1.msra.mxu0 %v435
    %1642 = vmatprep.subr.mxu0 %v432
    %1643 = vmatpush1.msra.mxu0 %v431
    %1644 = vmatprep.subr.mxu0 %v428
    %1645 = vmatpush1.msra.mxu0 %v427
    %1646 = vmatprep.subr.mxu0 %v424
    %1647 = vmatpush1.msra.mxu0 %v423
    %1648 = vmatprep.subr.mxu0 %v420
    %1649 = vmatpush1.msra.mxu0 %v419
    %1650 = vmatprep.subr.mxu0 %v416
    %1651 = vmatpush1.msra.mxu0 %v415
    %1652 = vmatprep.subr.mxu0 %v412
    %1653 = vmatpush1.msra.mxu0 %v411
    %1654 = vmatprep.subr.mxu0 %v408
    %1655 = vmatpush1.msra.mxu0 %v407
    %1656 = vmatprep.subr.mxu0 %v404
    %1657 = vmatpush1.msra.mxu0 %v403
    %1658 = vmatprep.subr.mxu0 %v400
    %1659 = vmatpush1.msra.mxu0 %v399
    %1660 = vmatprep.subr.mxu0 %v396
    %1661 = vmatpush1.msra.mxu0 %v395
    %1662 = vmatprep.subr.mxu0 %v392
    %1663 = vmatpush1.msra.mxu0 %v391
    %1664 = vmatprep.subr.mxu0 %v388
    %1665 = vmatpush1.msra.mxu0 %v387
    %1666 = vmatprep.subr.mxu0 %v384
    %1667 = vmatpush1.msra.mxu0 %v383
    %1668 = vmatprep.subr.mxu0 %v380
    %1669 = vmatpush1.msra.mxu0 %v379
    %1670 = vmatprep.subr.mxu0 %v376
    %1671 = vmatpush1.msra.mxu0 %v375
    %1672 = vmatprep.subr.mxu0 0.0
    %1673 = vmatpush2.msra.mxu0 0.0
    %1674 = vmatprep.subr.mxu0 0.0
    %1675 = vmatpush2.msra.mxu0 0.0
    %1676 = vmatprep.subr.mxu0 0.0
    %1677 = vmatpush2.msra.mxu0 0.0
    %1678 = vmatprep.subr.mxu0 0.0
    %1679 = vmatpush2.msra.mxu0 0.0
    %1680 = vmatprep.subr.mxu0 0.0
    %1681 = vmatpush2.msra.mxu0 0.0
    %1682 = vmatprep.subr.mxu0 0.0
    %1683 = vmatpush2.msra.mxu0 0.0
    %1684 = vmatprep.subr.mxu0 0.0
    %1685 = vmatpush2.msra.mxu0 0.0
    %1686 = vmatprep.subr.mxu0 0.0
    %1687 = vmatpush2.msra.mxu0 0.0
    %1688 = vmatprep.subr.mxu0 0.0
    %1689 = vmatpush2.msra.mxu0 0.0
    %1690 = vmatprep.subr.mxu0 0.0
    %1691 = vmatpush2.msra.mxu0 0.0
    %1692 = vmatprep.subr.mxu0 0.0
    %1693 = vmatpush2.msra.mxu0 0.0
    %1694 = vmatprep.subr.mxu0 0.0
    %1695 = vmatpush2.msra.mxu0 0.0
    %1696 = vmatprep.subr.mxu0 0.0
    %1697 = vmatpush2.msra.mxu0 0.0
    %1698 = vmatprep.subr.mxu0 0.0
    %1699 = vmatpush2.msra.mxu0 0.0
    %1700 = vmatprep.subr.mxu0 0.0
    %1701 = vmatpush2.msra.mxu0 0.0
    %1702 = vmatprep.subr.mxu0 0.0
    %1703 = vmatpush2.msra.mxu0 0.0
    %1704 = vmatprep.mubr.f32.mxu0 0.0
    %1705 = vmatmul.mubr.f32.gmra.mxu0 %v1636
    %v1706 = vpop.f32.mrf.mxu0
    %v1707 = vadd.f32 0.0, %v1706
    %v1708 = vpop.f32.mrf.mxu0
    %v1709 = vadd.f32 0.0, %v1708
    %1710 = vdwg.mxu0
    %1711 = vmatprep.subr.mxu0 %v438
    %1712 = vmatpush1.msra.mxu0 %v437
    %1713 = vmatprep.subr.mxu0 %v434
    %1714 = vmatpush1.msra.mxu0 %v433
    %1715 = vmatprep.subr.mxu0 %v430
    %1716 = vmatpush1.msra.mxu0 %v429
    %1717 = vmatprep.subr.mxu0 %v426
    %1718 = vmatpush1.msra.mxu0 %v425
    %1719 = vmatprep.subr.mxu0 %v422
    %1720 = vmatpush1.msra.mxu0 %v421
    %1721 = vmatprep.subr.mxu0 %v418
    %1722 = vmatpush1.msra.mxu0 %v417
    %1723 = vmatprep.subr.mxu0 %v414
    %1724 = vmatpush1.msra.mxu0 %v413
    %1725 = vmatprep.subr.mxu0 %v410
    %1726 = vmatpush1.msra.mxu0 %v409
    %1727 = vmatprep.subr.mxu0 %v406
    %1728 = vmatpush1.msra.mxu0 %v405
    %1729 = vmatprep.subr.mxu0 %v402
    %1730 = vmatpush1.msra.mxu0 %v401
    %1731 = vmatprep.subr.mxu0 %v398
    %1732 = vmatpush1.msra.mxu0 %v397
    %1733 = vmatprep.subr.mxu0 %v394
    %1734 = vmatpush1.msra.mxu0 %v393
    %1735 = vmatprep.subr.mxu0 %v390
    %1736 = vmatpush1.msra.mxu0 %v389
    %1737 = vmatprep.subr.mxu0 %v386
    %1738 = vmatpush1.msra.mxu0 %v385
    %1739 = vmatprep.subr.mxu0 %v382
    %1740 = vmatpush1.msra.mxu0 %v381
    %1741 = vmatprep.subr.mxu0 %v378
    %1742 = vmatpush1.msra.mxu0 %v377
    %1743 = vmatprep.subr.mxu0 0.0
    %1744 = vmatpush2.msra.mxu0 0.0
    %1745 = vmatprep.subr.mxu0 0.0
    %1746 = vmatpush2.msra.mxu0 0.0
    %1747 = vmatprep.subr.mxu0 0.0
    %1748 = vmatpush2.msra.mxu0 0.0
    %1749 = vmatprep.subr.mxu0 0.0
    %1750 = vmatpush2.msra.mxu0 0.0
    %1751 = vmatprep.subr.mxu0 0.0
    %1752 = vmatpush2.msra.mxu0 0.0
    %1753 = vmatprep.subr.mxu0 0.0
    %1754 = vmatpush2.msra.mxu0 0.0
    %1755 = vmatprep.subr.mxu0 0.0
    %1756 = vmatpush2.msra.mxu0 0.0
    %1757 = vmatprep.subr.mxu0 0.0
    %1758 = vmatpush2.msra.mxu0 0.0
    %1759 = vmatprep.subr.mxu0 0.0
    %1760 = vmatpush2.msra.mxu0 0.0
    %1761 = vmatprep.subr.mxu0 0.0
    %1762 = vmatpush2.msra.mxu0 0.0
    %1763 = vmatprep.subr.mxu0 0.0
    %1764 = vmatpush2.msra.mxu0 0.0
    %1765 = vmatprep.subr.mxu0 0.0
    %1766 = vmatpush2.msra.mxu0 0.0
    %1767 = vmatprep.subr.mxu0 0.0
    %1768 = vmatpush2.msra.mxu0 0.0
    %1769 = vmatprep.subr.mxu0 0.0
    %1770 = vmatpush2.msra.mxu0 0.0
    %1771 = vmatprep.subr.mxu0 0.0
    %1772 = vmatpush2.msra.mxu0 0.0
    %1773 = vmatprep.subr.mxu0 0.0
    %1774 = vmatpush2.msra.mxu0 0.0
    %1775 = vmatprep.mubr.f32.mxu0 0.0
    %1776 = vmatmul.mubr.f32.gmra.mxu0 %v1636
    %v1777 = vpop.f32.mrf.mxu0
    %v1778 = vadd.f32 0.0, %v1777
    %v1779 = vpop.f32.mrf.mxu0
    %v1780 = vadd.f32 0.0, %v1779
    %1781 = vdwg.mxu0
    %v1786 = vcombine.low %v1707, %v1709
    %v1787 = vcombine.low %v1778, %v1780
    %v1789 = vunpack.c.l.s4 1966171168
    %v1790 = vunpack.c.0.s8 %v1789
    %v1791 = vlaneseq
    %v1792 = vshrl.u32 %v1791, 7
    %v1793 = vsub.s32 %v1790, %v1792
    %v1794 = vrot.slane %v1786, %v1793
    %v1796 = vunpack.c.l.s4 1966171168
    %v1797 = vunpack.c.0.s8 %v1796
    %v1798 = vlaneseq
    %v1799 = vshrl.u32 %v1798, 7
    %v1800 = vsub.s32 %v1797, %v1799
    %v1801 = vrot.slane %v1787, %v1800
    %v1802 = vcombine.low %v1794, %v1801
    %v1804 = vunpack.c.l.s4 1966171168
    %v1805 = vunpack.c.0.s8 %v1804
    %v1806 = vlaneseq
    %v1807 = vshrl.u32 %v1806, 7
    %v1808 = vsub.s32 %v1805, %v1807
    %v1809 = vrot.slane %v1802, %v1808
    %v1811 = vadd.f32 %v1639, %v1809
    %v1812 = vmul.f32 %v1811, 0.5
    %v1813 = vtanh.pop %v1812
    %v1814 = vadd.f32 %v1813, 1.0
    %v1815 = vmul.f32 %v1814, 0.5
    %v1817 = vrot.slane %v1811, 1
    %v1819 = vmul.f32 %v1817, 0.5
    %v1820 = vtanh.pop %v1819
    %v1821 = vadd.f32 %v1820, 1.0
    %v1822 = vmul.f32 %v1821, 0.5
    %v1823 = vrot.slane %v1811, 2
    %v1825 = vtanh.pop %v1823
    %v1826 = vrot.slane %v1811, 3
    %v1828 = vmul.f32 %v1826, 0.5
    %v1829 = vtanh.pop %v1828
    %v1830 = vadd.f32 %v1829, 1.0
    %v1831 = vmul.f32 %v1830, 0.5
    %v1832 = vmul.f32 %v1822, %v1634
    %v1833 = vmul.f32 %v1815, %v1825
    %v1834 = vadd.f32 %v1832, %v1833
    %v1835 = vtanh.pop %v1834
    %v1836 = vmul.f32 %v1831, %v1835
    %1837 = vst [vmem:[#allocation3 + $0x6] sm:$0x1] %v1836
    %s1838 = scalar_lea.vmem [#allocation2], 7
    %v1839 = vld [vmem:[%s1838] ss:$8 sm:$0xf]
    %1840 = vmatprep.subr.mxu0 %v436
    %1841 = vmatpush1.msra.mxu0 %v435
    %1842 = vmatprep.subr.mxu0 %v432
    %1843 = vmatpush1.msra.mxu0 %v431
    %1844 = vmatprep.subr.mxu0 %v428
    %1845 = vmatpush1.msra.mxu0 %v427
    %1846 = vmatprep.subr.mxu0 %v424
    %1847 = vmatpush1.msra.mxu0 %v423
    %1848 = vmatprep.subr.mxu0 %v420
    %1849 = vmatpush1.msra.mxu0 %v419
    %1850 = vmatprep.subr.mxu0 %v416
    %1851 = vmatpush1.msra.mxu0 %v415
    %1852 = vmatprep.subr.mxu0 %v412
    %1853 = vmatpush1.msra.mxu0 %v411
    %1854 = vmatprep.subr.mxu0 %v408
    %1855 = vmatpush1.msra.mxu0 %v407
    %1856 = vmatprep.subr.mxu0 %v404
    %1857 = vmatpush1.msra.mxu0 %v403
    %1858 = vmatprep.subr.mxu0 %v400
    %1859 = vmatpush1.msra.mxu0 %v399
    %1860 = vmatprep.subr.mxu0 %v396
    %1861 = vmatpush1.msra.mxu0 %v395
    %1862 = vmatprep.subr.mxu0 %v392
    %1863 = vmatpush1.msra.mxu0 %v391
    %1864 = vmatprep.subr.mxu0 %v388
    %1865 = vmatpush1.msra.mxu0 %v387
    %1866 = vmatprep.subr.mxu0 %v384
    %1867 = vmatpush1.msra.mxu0 %v383
    %1868 = vmatprep.subr.mxu0 %v380
    %1869 = vmatpush1.msra.mxu0 %v379
    %1870 = vmatprep.subr.mxu0 %v376
    %1871 = vmatpush1.msra.mxu0 %v375
    %1872 = vmatprep.subr.mxu0 0.0
    %1873 = vmatpush2.msra.mxu0 0.0
    %1874 = vmatprep.subr.mxu0 0.0
    %1875 = vmatpush2.msra.mxu0 0.0
    %1876 = vmatprep.subr.mxu0 0.0
    %1877 = vmatpush2.msra.mxu0 0.0
    %1878 = vmatprep.subr.mxu0 0.0
    %1879 = vmatpush2.msra.mxu0 0.0
    %1880 = vmatprep.subr.mxu0 0.0
    %1881 = vmatpush2.msra.mxu0 0.0
    %1882 = vmatprep.subr.mxu0 0.0
    %1883 = vmatpush2.msra.mxu0 0.0
    %1884 = vmatprep.subr.mxu0 0.0
    %1885 = vmatpush2.msra.mxu0 0.0
    %1886 = vmatprep.subr.mxu0 0.0
    %1887 = vmatpush2.msra.mxu0 0.0
    %1888 = vmatprep.subr.mxu0 0.0
    %1889 = vmatpush2.msra.mxu0 0.0
    %1890 = vmatprep.subr.mxu0 0.0
    %1891 = vmatpush2.msra.mxu0 0.0
    %1892 = vmatprep.subr.mxu0 0.0
    %1893 = vmatpush2.msra.mxu0 0.0
    %1894 = vmatprep.subr.mxu0 0.0
    %1895 = vmatpush2.msra.mxu0 0.0
    %1896 = vmatprep.subr.mxu0 0.0
    %1897 = vmatpush2.msra.mxu0 0.0
    %1898 = vmatprep.subr.mxu0 0.0
    %1899 = vmatpush2.msra.mxu0 0.0
    %1900 = vmatprep.subr.mxu0 0.0
    %1901 = vmatpush2.msra.mxu0 0.0
    %1902 = vmatprep.subr.mxu0 0.0
    %1903 = vmatpush2.msra.mxu0 0.0
    %1904 = vmatprep.mubr.f32.mxu0 0.0
    %1905 = vmatmul.mubr.f32.gmra.mxu0 %v1836
    %v1906 = vpop.f32.mrf.mxu0
    %v1907 = vadd.f32 0.0, %v1906
    %v1908 = vpop.f32.mrf.mxu0
    %v1909 = vadd.f32 0.0, %v1908
    %1910 = vdwg.mxu0
    %1911 = vmatprep.subr.mxu0 %v438
    %1912 = vmatpush1.msra.mxu0 %v437
    %1913 = vmatprep.subr.mxu0 %v434
    %1914 = vmatpush1.msra.mxu0 %v433
    %1915 = vmatprep.subr.mxu0 %v430
    %1916 = vmatpush1.msra.mxu0 %v429
    %1917 = vmatprep.subr.mxu0 %v426
    %1918 = vmatpush1.msra.mxu0 %v425
    %1919 = vmatprep.subr.mxu0 %v422
    %1920 = vmatpush1.msra.mxu0 %v421
    %1921 = vmatprep.subr.mxu0 %v418
    %1922 = vmatpush1.msra.mxu0 %v417
    %1923 = vmatprep.subr.mxu0 %v414
    %1924 = vmatpush1.msra.mxu0 %v413
    %1925 = vmatprep.subr.mxu0 %v410
    %1926 = vmatpush1.msra.mxu0 %v409
    %1927 = vmatprep.subr.mxu0 %v406
    %1928 = vmatpush1.msra.mxu0 %v405
    %1929 = vmatprep.subr.mxu0 %v402
    %1930 = vmatpush1.msra.mxu0 %v401
    %1931 = vmatprep.subr.mxu0 %v398
    %1932 = vmatpush1.msra.mxu0 %v397
    %1933 = vmatprep.subr.mxu0 %v394
    %1934 = vmatpush1.msra.mxu0 %v393
    %1935 = vmatprep.subr.mxu0 %v390
    %1936 = vmatpush1.msra.mxu0 %v389
    %1937 = vmatprep.subr.mxu0 %v386
    %1938 = vmatpush1.msra.mxu0 %v385
    %1939 = vmatprep.subr.mxu0 %v382
    %1940 = vmatpush1.msra.mxu0 %v381
    %1941 = vmatprep.subr.mxu0 %v378
    %1942 = vmatpush1.msra.mxu0 %v377
    %1943 = vmatprep.subr.mxu0 0.0
    %1944 = vmatpush2.msra.mxu0 0.0
    %1945 = vmatprep.subr.mxu0 0.0
    %1946 = vmatpush2.msra.mxu0 0.0
    %1947 = vmatprep.subr.mxu0 0.0
    %1948 = vmatpush2.msra.mxu0 0.0
    %1949 = vmatprep.subr.mxu0 0.0
    %1950 = vmatpush2.msra.mxu0 0.0
    %1951 = vmatprep.subr.mxu0 0.0
    %1952 = vmatpush2.msra.mxu0 0.0
    %1953 = vmatprep.subr.mxu0 0.0
    %1954 = vmatpush2.msra.mxu0 0.0
    %1955 = vmatprep.subr.mxu0 0.0
    %1956 = vmatpush2.msra.mxu0 0.0
    %1957 = vmatprep.subr.mxu0 0.0
    %1958 = vmatpush2.msra.mxu0 0.0
    %1959 = vmatprep.subr.mxu0 0.0
    %1960 = vmatpush2.msra.mxu0 0.0
    %1961 = vmatprep.subr.mxu0 0.0
    %1962 = vmatpush2.msra.mxu0 0.0
    %1963 = vmatprep.subr.mxu0 0.0
    %1964 = vmatpush2.msra.mxu0 0.0
    %1965 = vmatprep.subr.mxu0 0.0
    %1966 = vmatpush2.msra.mxu0 0.0
    %1967 = vmatprep.subr.mxu0 0.0
    %1968 = vmatpush2.msra.mxu0 0.0
    %1969 = vmatprep.subr.mxu0 0.0
    %1970 = vmatpush2.msra.mxu0 0.0
    %1971 = vmatprep.subr.mxu0 0.0
    %1972 = vmatpush2.msra.mxu0 0.0
    %1973 = vmatprep.subr.mxu0 0.0
    %1974 = vmatpush2.msra.mxu0 0.0
    %1975 = vmatprep.mubr.f32.mxu0 0.0
    %1976 = vmatmul.mubr.f32.gmra.mxu0 %v1836
    %v1977 = vpop.f32.mrf.mxu0
    %v1978 = vadd.f32 0.0, %v1977
    %v1979 = vpop.f32.mrf.mxu0
    %v1980 = vadd.f32 0.0, %v1979
    %1981 = vdwg.mxu0
    %v1986 = vcombine.low %v1907, %v1909
    %v1987 = vcombine.low %v1978, %v1980
    %v1989 = vunpack.c.l.s4 1966171168
    %v1990 = vunpack.c.0.s8 %v1989
    %v1991 = vlaneseq
    %v1992 = vshrl.u32 %v1991, 7
    %v1993 = vsub.s32 %v1990, %v1992
    %v1994 = vrot.slane %v1986, %v1993
    %v1996 = vunpack.c.l.s4 1966171168
    %v1997 = vunpack.c.0.s8 %v1996
    %v1998 = vlaneseq
    %v1999 = vshrl.u32 %v1998, 7
    %v2000 = vsub.s32 %v1997, %v1999
    %v2001 = vrot.slane %v1987, %v2000
    %v2002 = vcombine.low %v1994, %v2001
    %v2004 = vunpack.c.l.s4 1966171168
    %v2005 = vunpack.c.0.s8 %v2004
    %v2006 = vlaneseq
    %v2007 = vshrl.u32 %v2006, 7
    %v2008 = vsub.s32 %v2005, %v2007
    %v2009 = vrot.slane %v2002, %v2008
    %v2011 = vadd.f32 %v1839, %v2009
    %v2012 = vmul.f32 %v2011, 0.5
    %v2013 = vtanh.pop %v2012
    %v2014 = vadd.f32 %v2013, 1.0
    %v2015 = vmul.f32 %v2014, 0.5
    %v2017 = vrot.slane %v2011, 1
    %v2019 = vmul.f32 %v2017, 0.5
    %v2020 = vtanh.pop %v2019
    %v2021 = vadd.f32 %v2020, 1.0
    %v2022 = vmul.f32 %v2021, 0.5
    %v2023 = vrot.slane %v2011, 2
    %v2025 = vtanh.pop %v2023
    %v2026 = vrot.slane %v2011, 3
    %v2028 = vmul.f32 %v2026, 0.5
    %v2029 = vtanh.pop %v2028
    %v2030 = vadd.f32 %v2029, 1.0
    %v2031 = vmul.f32 %v2030, 0.5
    %v2032 = vmul.f32 %v2022, %v1834
    %v2033 = vmul.f32 %v2015, %v2025
    %v2034 = vadd.f32 %v2032, %v2033
    %v2035 = vtanh.pop %v2034
    %v2036 = vmul.f32 %v2031, %v2035
    %2037 = vst [vmem:[#allocation3 + $0x7] sm:$0x1] %v2036
    %v2038 = vld [vmem:[#allocation3] sm:$0xff]
    %v2039 = vld [vmem:[#allocation10] sm:$0xff]
    %v2040 = vld [vmem:[#allocation10 + $0x8] sm:$0xff]
    %v2041 = vld [vmem:[#allocation10 + $0x10] sm:$0xff]
    %v2042 = vld [vmem:[#allocation10 + $0x18] sm:$0xff]
    %v2043 = vld [vmem:[#allocation10 + $0x20] sm:$0xff]
    %v2044 = vld [vmem:[#allocation10 + $0x28] sm:$0xff]
    %v2045 = vld [vmem:[#allocation10 + $0x30] sm:$0xff]
    %v2046 = vld [vmem:[#allocation10 + $0x38] sm:$0xff]
    %v2047 = vld [vmem:[#allocation10 + $0x40] sm:$0xff]
    %v2048 = vld [vmem:[#allocation10 + $0x48] sm:$0xff]
    %v2049 = vld [vmem:[#allocation10 + $0x50] sm:$0xff]
    %v2050 = vld [vmem:[#allocation10 + $0x58] sm:$0xff]
    %v2051 = vld [vmem:[#allocation10 + $0x60] sm:$0xff]
    %v2052 = vld [vmem:[#allocation10 + $0x68] sm:$0xff]
    %v2053 = vld [vmem:[#allocation10 + $0x70] sm:$0xff]
    %v2054 = vld [vmem:[#allocation10 + $0x78] sm:$0xff]
    %v2055 = vld [vmem:[%s5] sm:$0x1]
    %v2057 = vlaneseq
    %v2058 = vshrl.u32 %v2057, 7
    %v2059 = vsub.s32 0, %v2058
    %v2060 = vrot.slane %v2055, %v2059
    %2062 = vmatprep.subr.mxu0 0.0
    %2063 = vmatpush1.msra.mxu0 %v2054
    %2064 = vmatprep.subr.mxu0 0.0
    %2065 = vmatpush1.msra.mxu0 %v2053
    %2066 = vmatprep.subr.mxu0 0.0
    %2067 = vmatpush1.msra.mxu0 %v2052
    %2068 = vmatprep.subr.mxu0 0.0
    %2069 = vmatpush1.msra.mxu0 %v2051
    %2070 = vmatprep.subr.mxu0 0.0
    %2071 = vmatpush1.msra.mxu0 %v2050
    %2072 = vmatprep.subr.mxu0 0.0
    %2073 = vmatpush1.msra.mxu0 %v2049
    %2074 = vmatprep.subr.mxu0 0.0
    %2075 = vmatpush1.msra.mxu0 %v2048
    %2076 = vmatprep.subr.mxu0 0.0
    %2077 = vmatpush1.msra.mxu0 %v2047
    %2078 = vmatprep.subr.mxu0 0.0
    %2079 = vmatpush1.msra.mxu0 %v2046
    %2080 = vmatprep.subr.mxu0 0.0
    %2081 = vmatpush1.msra.mxu0 %v2045
    %2082 = vmatprep.subr.mxu0 0.0
    %2083 = vmatpush1.msra.mxu0 %v2044
    %2084 = vmatprep.subr.mxu0 0.0
    %2085 = vmatpush1.msra.mxu0 %v2043
    %2086 = vmatprep.subr.mxu0 0.0
    %2087 = vmatpush1.msra.mxu0 %v2042
    %2088 = vmatprep.subr.mxu0 0.0
    %2089 = vmatpush1.msra.mxu0 %v2041
    %2090 = vmatprep.subr.mxu0 0.0
    %2091 = vmatpush1.msra.mxu0 %v2040
    %2092 = vmatprep.subr.mxu0 0.0
    %2093 = vmatpush1.msra.mxu0 %v2039
    %2094 = vmatprep.subr.mxu0 0.0
    %2095 = vmatpush2.msra.mxu0 0.0
    %2096 = vmatprep.subr.mxu0 0.0
    %2097 = vmatpush2.msra.mxu0 0.0
    %2098 = vmatprep.subr.mxu0 0.0
    %2099 = vmatpush2.msra.mxu0 0.0
    %2100 = vmatprep.subr.mxu0 0.0
    %2101 = vmatpush2.msra.mxu0 0.0
    %2102 = vmatprep.subr.mxu0 0.0
    %2103 = vmatpush2.msra.mxu0 0.0
    %2104 = vmatprep.subr.mxu0 0.0
    %2105 = vmatpush2.msra.mxu0 0.0
    %2106 = vmatprep.subr.mxu0 0.0
    %2107 = vmatpush2.msra.mxu0 0.0
    %2108 = vmatprep.subr.mxu0 0.0
    %2109 = vmatpush2.msra.mxu0 0.0
    %2110 = vmatprep.subr.mxu0 0.0
    %2111 = vmatpush2.msra.mxu0 0.0
    %2112 = vmatprep.subr.mxu0 0.0
    %2113 = vmatpush2.msra.mxu0 0.0
    %2114 = vmatprep.subr.mxu0 0.0
    %2115 = vmatpush2.msra.mxu0 0.0
    %2116 = vmatprep.subr.mxu0 0.0
    %2117 = vmatpush2.msra.mxu0 0.0
    %2118 = vmatprep.subr.mxu0 0.0
    %2119 = vmatpush2.msra.mxu0 0.0
    %2120 = vmatprep.subr.mxu0 0.0
    %2121 = vmatpush2.msra.mxu0 0.0
    %2122 = vmatprep.subr.mxu0 0.0
    %2123 = vmatpush2.msra.mxu0 0.0
    %2124 = vmatprep.subr.mxu0 0.0
    %2125 = vmatpush2.msra.mxu0 0.0
    %2126 = vmatprep.mubr.f32.mxu0 0.0
    %2127 = vmatmul.mubr.f32.gmra.mxu0 %v2038
    %v2128 = vpop.f32.mrf.mxu0
    %v2129 = vadd.f32 %v2060, %v2128
    %v2130 = vpop.f32.mrf.mxu0
    %2131 = vdwg.mxu0
    %v2132 = vmul.f32 %v2129, 0.5
    %v2133 = vtanh.pop %v2132
    %v2134 = vadd.f32 %v2133, 1.0
    %v2135 = vmul.f32 %v2134, 0.5
    %2136 = vst [vmem:[#allocation12] sm:$0xff] %v2135
    // Predicated region
    $region42: #{tpu_custom_call.1} parent=1 // pred_check
      _
    $region43: #{tpu_custom_call.1} parent=1 // pred_check_branch
      %2138 = sbr.rel (0) target = $region45
    $region44: #{tpu_custom_call.1} parent=1 // pred_region
      %s2140 = ssub.s32 128, 128
      %2141 = vsyncadd [#allocation6], %s2140
      %s2143 = sshll.u32 [#allocation12], 4
      %s2144 = int_to_ptr.vmem [resolvable:$true] %s2143
      %2146 = dma.vmem_to_hbm [thread:$0]  %s2144, 128, %s6, [#allocation6]
    $region45: #{tpu_custom_call.1} parent=1 // pred_fallthru
      _
    // Predicated region
    $region46: #{tpu_custom_call.1} parent=1 // pred_check
      _
    $region47: #{tpu_custom_call.1} parent=1 // pred_check_branch
      %2148 = sbr.rel (0) target = $region49
    $region48: #{tpu_custom_call.1} parent=1 // pred_region
      %2149 = dma.done [#allocation6], 128
    $region49: #{tpu_custom_call.1} parent=1 // pred_fallthru
      _
    %2150 = vsyncpa [#allocation5], 1
    %2151 = vsyncpa [#allocation8], 1
    %2152 = vsyncpa [#allocation11], 1
    %2153 = vsyncpa [#allocation6], 1

</llo_original>
